<compile_context>
chip_gen: v6e
topology: v6e:2x2x1
jax: 0.10.0
libtpu: 0.0.40
codegen_flags: <defaults>
</compile_context>

<pallas_src>
import jax
import jax.numpy as jnp
from jax import lax
from jax.experimental import pallas as pl
from jax.experimental.pallas import tpu as pltpu


def _round_up(x, m):
    return (x + m - 1) // m * m


# ----------------------------- Pallas kernel ------------------------------ #
def _linear_if_kernel(spike_ref, wT_ref, biasT_ref, out_st_ref, out_sc_ref,
                      pot_ref):
    """Grid = (N tiles, D_out tiles, T tiles); T innermost ('arbitrary').

    spike_ref : (t_blk, n_blk, D_in_p)      bf16 time-major spike block
    wT_ref    : (D_in_p, d_out_blk)         bf16 folded weight (transposed)
    biasT_ref : (1, d_out_blk)              f32 biasNorm / T
    out_st_ref: (t_blk, n_blk, d_out_blk)   bf16 spike-train output block
    out_sc_ref: (n_blk, d_out_blk)          f32 spike count (resident over T)
    pot_ref   : VMEM scratch (n_blk, d_out_blk) f32 membrane potential carry
    """
    ti = pl.program_id(2)

    @pl.when(ti == 0)
    def _():
        pot_ref[...] = jnp.zeros_like(pot_ref)
        out_sc_ref[...] = jnp.zeros_like(out_sc_ref)

    t_b, n_b, d_in = spike_ref.shape
    d_out = wT_ref.shape[1]

    # One MXU matmul for every timestep of this block (M = t_blk * n_blk).
    # The currents (bias/T folded in once) are staged directly in the output
    # block -- no separate current scratch buffer.
    cur = jnp.dot(spike_ref[...].reshape(t_b * n_b, d_in), wT_ref[...],
                  preferred_element_type=jnp.float32)
    cur = cur + biasT_ref[...]
    out_st_ref[...] = cur.reshape(t_b, n_b, d_out).astype(out_st_ref.dtype)

    # Integrate-and-fire recurrence: pure VPU work in f32; the spike count is
    # accumulated straight into the resident out_sc block (low vreg pressure).
    def body(t, pot):
        new_pot = pot + out_st_ref[t].astype(jnp.float32)
        spk = (new_pot >= 1.0).astype(jnp.float32)
        out_st_ref[t] = spk.astype(out_st_ref.dtype)   # dense (n_blk, d_out) slab
        out_sc_ref[...] += spk
        return new_pot - spk

    pot_ref[...] = lax.fori_loop(0, t_b, body, pot_ref[...], unroll=True)


# ------------------------- tiling / VMEM sizing ---------------------------- #
def _vmem_capacity_bytes():
    try:
        return int(pltpu.get_tpu_info().vmem_capacity_bytes)
    except Exception:
        return 64 << 20          # conservative (v7x per-TensorCore)


def _largest_divisor_leq(n, cap):
    cap = max(1, min(n, cap))
    for d in range(cap, 0, -1):
        if n % d == 0:
            return d
    return 1


def _choose_tiles(N, T, d_in_p, d_out_p, budget_bytes):
    t_blk = _largest_divisor_leq(T, 8)            # never pad the time axis
    n_blk = min(128, _round_up(N, 16))            # bf16 sublane packing: x16
    d_out_cands = [c for c in (512, 256, 128) if d_out_p % c == 0]
    d_out_blk = d_out_cands[0]

    def vmem_est(nb, tb, db):
        spike_in = 2 * tb * nb * d_in_p * 2       # bf16, double buffered
        weight = 2 * d_in_p * db * 2              # bf16 (worst case 2 buffers)
        bias = 2 * db * 4
        out_st = 2 * tb * nb * db * 2             # bf16, double buffered
        out_sc = 2 * nb * db * 4
        pot = nb * db * 4
        return spike_in + weight + bias + out_st + out_sc + pot + (1 << 20)

    while vmem_est(n_blk, t_blk, d_out_blk) > budget_bytes:
        if d_out_blk > d_out_cands[-1]:
            d_out_blk = next(c for c in d_out_cands if c < d_out_blk)
        elif n_blk > 16:
            n_blk = _round_up(n_blk // 2, 16)
        elif t_blk > 1:
            t_blk = _largest_divisor_leq(T, t_blk - 1)
        else:
            break   # TODO(synk): tile the D_in (reduction) axis for very wide inputs
    return n_blk, t_blk, d_out_blk


# ------------------------------- wrapper ----------------------------------- #
def linear_if(spike_in, weight_norm, bias_norm):
    """spike_in: (N, T, D_in); weight_norm: (D_out, D_in); bias_norm: (D_out,).

    Returns (spike_out (N, T, D_out) f32, spike_count (N, D_out) f32).
    """
    N, T, D_in = spike_in.shape
    D_out = weight_norm.shape[0]

    d_in_p = _round_up(D_in, 128)
    d_out_p = _round_up(D_out, 128)

    vmem_cap = _vmem_capacity_bytes()
    vmem_limit = max(32 << 20, min(vmem_cap * 3 // 4, 64 << 20))
    n_blk, t_blk, d_out_blk = _choose_tiles(N, T, d_in_p, d_out_p,
                                            int(vmem_limit * 0.8))
    n_p = _round_up(N, n_blk)

    # Time-major + zero-pad + bf16 cast (spikes are exactly {0,1} -> lossless);
    # these fuse into a single XLA relayout pass on the input.
    st = jnp.transpose(spike_in, (1, 0, 2)).astype(jnp.bfloat16)
    st = jnp.pad(st, ((0, 0), (0, n_p - N), (0, d_in_p - D_in)))
    wT = jnp.pad(weight_norm.T.astype(jnp.bfloat16),
                 ((0, d_in_p - D_in), (0, d_out_p - D_out)))        # (Din_p, Dout_p)
    biasT = jnp.pad((bias_norm.astype(jnp.float32) / T)[None, :],
                    ((0, 0), (0, d_out_p - D_out)))                 # (1, Dout_p)

    grid = (n_p // n_blk, d_out_p // d_out_blk, T // t_blk)

    def build_call(single_buffer_weight):
        w_kwargs = (dict(pipeline_mode=pl.Buffered(1))
                    if single_buffer_weight else {})
        return pl.pallas_call(
            _linear_if_kernel,
            out_shape=(
                jax.ShapeDtypeStruct((T, n_p, d_out_p), jnp.bfloat16),
                jax.ShapeDtypeStruct((n_p, d_out_p), jnp.float32),
            ),
            grid_spec=pltpu.PrefetchScalarGridSpec(
                num_scalar_prefetch=0,
                grid=grid,
                in_specs=[
                    pl.BlockSpec((t_blk, n_blk, d_in_p),
                                 lambda ni, di, ti: (ti, ni, 0)),
                    pl.BlockSpec((d_in_p, d_out_blk),
                                 lambda ni, di, ti: (0, di), **w_kwargs),
                    pl.BlockSpec((1, d_out_blk),
                                 lambda ni, di, ti: (0, di)),
                ],
                out_specs=(
                    pl.BlockSpec((t_blk, n_blk, d_out_blk),
                                 lambda ni, di, ti: (ti, ni, di)),
                    pl.BlockSpec((n_blk, d_out_blk),
                                 lambda ni, di, ti: (ni, di)),
                ),
                scratch_shapes=[
                    pltpu.VMEM((n_blk, d_out_blk), jnp.float32),  # membrane potential
                ],
            ),
            compiler_params=pltpu.CompilerParams(
                dimension_semantics=("parallel", "parallel", "arbitrary"),
                vmem_limit_bytes=int(vmem_limit)),
        )

    try:
        out_st_p, out_sc_p = build_call(True)(st, wT, biasT)
    except Exception:
        # Fallback for JAX builds without BlockSpec.pipeline_mode / Buffered(1):
        # the weight block is simply double-buffered (default behavior).
        out_st_p, out_sc_p = build_call(False)(st, wT, biasT)

    # slice + transpose + f32 cast fuse into one bf16-read output pass.
    out_st = jnp.transpose(out_st_p[:, :N, :D_out], (1, 0, 2)).astype(jnp.float32)
    out_sc = out_sc_p[:N, :D_out]
    return out_st, out_sc


# ------------------------------ module glue -------------------------------- #
def init_params(key, D_in, D_out):
    """Deterministic parameter init mirroring LinearBN1d.__init__ shapes."""
    k1, k2, k3 = jax.random.split(key, 3)
    bound = 1.0 / jnp.sqrt(jnp.float32(D_in))          # torch Linear default init range
    weight = jax.random.uniform(k1, (D_out, D_in), jnp.float32, -bound, bound)
    bias = jax.random.uniform(k2, (D_out,), jnp.float32, -bound, bound)
    gamma = 2.0 * jax.random.normal(k3, (D_out,), jnp.float32)  # normal_(bn.weight, 0, 2.0)
    beta = jnp.zeros((D_out,), jnp.float32)
    running_mean = jnp.zeros((D_out,), jnp.float32)
    running_var = jnp.ones((D_out,), jnp.float32)
    return dict(weight=weight, bias=bias, gamma=gamma, beta=beta,
                running_mean=running_mean, running_var=running_var)


def linear_bn1d_forward(params, input_feature_st, input_features_sc,
                        momentum=0.9, eps=1e-4, training=True):
    """Reproduces LinearBN1d.forward: returns (output_st, output_sc)."""
    w, b = params["weight"], params["bias"]
    gamma, beta = params["gamma"], params["beta"]

    # ANN branch (glue): Linear -> BatchNorm1d -> ReLU.  In train mode this
    # updates the running stats, which the spiking branch then reads.
    y = input_features_sc @ w.T + b                    # (N, D_out)
    N = y.shape[0]
    if training:
        batch_mean = jnp.mean(y, axis=0)
        batch_var_b = jnp.mean((y - batch_mean) ** 2, axis=0)       # biased (normalization)
        batch_var_u = batch_var_b * N / max(N - 1, 1)               # unbiased (running stats)
        running_mean = (1.0 - momentum) * params["running_mean"] + momentum * batch_mean
        running_var = (1.0 - momentum) * params["running_var"] + momentum * batch_var_u
        norm = (y - batch_mean) / jnp.sqrt(batch_var_b + eps)
    else:
        running_mean, running_var = params["running_mean"], params["running_var"]
        norm = (y - running_mean) / jnp.sqrt(running_var + eps)
    _output_ann = jax.nn.relu(gamma * norm + beta)     # computed in torch, not returned

    # Fold BN into the spiking linear layer (ratio uses sqrt(var) with NO eps,
    # exactly as the torch code does; can overflow if running_var -> 0).
    ratio = gamma / jnp.sqrt(running_var)              # (D_out,)
    weight_norm = w * ratio[:, None]                   # (D_out, D_in)
    bias_norm = (b - running_mean) * ratio + beta      # (D_out,)

    out_st, out_sc = linear_if(input_feature_st, weight_norm, bias_norm)
    return out_st, out_sc


if __name__ == "__main__":
    key = jax.random.PRNGKey(0)
    # NOTE: feature dims are padded to 128 lanes inside linear_if; at the demo
    # size (32) the kernel is mostly padding -- it targets D >= 128 layers.
    N, T, D_in, D_out = 2, 8, 32, 32
    kp, ks, kc = jax.random.split(key, 3)

    params = init_params(kp, D_in, D_out)
    # binary spike train input in {0, 1}, shape (N, T, D_in)
    input_feature_st = (jax.random.uniform(ks, (N, T, D_in)) < 0.5).astype(jnp.float32)
    # spike-count / feature input, shape (N, D_in)
    input_features_sc = jax.random.normal(kc, (N, D_in), jnp.float32)

    out_st, out_sc = linear_bn1d_forward(params, input_feature_st, input_features_sc)
    out_st, out_sc = jax.block_until_ready((out_st, out_sc))

    assert out_st.shape == (N, T, D_out) and out_sc.shape == (N, D_out)
    # spike train is binary, and the spike count equals its sum over time
    assert bool(jnp.all((out_st == 0.0) | (out_st == 1.0)))
    assert bool(jnp.allclose(out_sc, out_st.sum(axis=1), atol=1e-5))
    print("KERNEL_OK")
</pallas_src>

<mosaic_0001>
module attributes {stable_mosaic.version = 11 : i64} {
  func.func @_linear_if_kernel(%arg0: i32, %arg1: i32, %arg2: i32, %arg3: memref<8x16x128xbf16, #tpu.memory_space<vmem>>, %arg4: memref<128x128xbf16, #tpu.memory_space<vmem>>, %arg5: memref<1x128xf32, #tpu.memory_space<vmem>>, %arg6: memref<8x16x128xbf16, #tpu.memory_space<vmem>>, %arg7: memref<16x128xf32, #tpu.memory_space<vmem>>, %arg8: memref<16x128xf32, #tpu.memory_space<vmem>>) attributes {dimension_semantics = [#tpu.dimension_semantics<parallel>, #tpu.dimension_semantics<parallel>, #tpu.dimension_semantics<arbitrary>], iteration_bounds = array<i64: 1, 1, 1>, scalar_prefetch = 0 : i64, scratch_operands = 1 : i64, tpu.core_type = #tpu.core_type<tc>, window_params = [{transform_indices = @transform_0, window_bounds = array<i64: 8, 16, 128>}, {pipeline_mode = #tpu.pipeline_mode<synchronous>, transform_indices = @transform_1, window_bounds = array<i64: 128, 128>}, {transform_indices = @transform_2, window_bounds = array<i64: 1, 128>}, {transform_indices = @transform_3, window_bounds = array<i64: 8, 16, 128>}, {transform_indices = @transform_4, window_bounds = array<i64: 16, 128>}]} {
    %c0_i32 = arith.constant 0 : i32
    %0 = arith.cmpi eq, %arg2, %c0_i32 : i32
    %1 = arith.extui %0 : i1 to i32
    %c0_i32_0 = arith.constant 0 : i32
    %2 = arith.cmpi ne, %1, %c0_i32_0 : i32
    scf.if %2 {
      %cst_87 = arith.constant 0.000000e+00 : f32
      %159 = vector.broadcast %cst_87 : f32 to vector<16x128xf32>
      %c0_88 = arith.constant 0 : index
      %c0_89 = arith.constant 0 : index
      %160 = vector.load %arg8[%c0_88, %c0_89] : memref<16x128xf32, #tpu.memory_space<vmem>>, vector<16x128xf32>
      tpu.vector_store %arg8[%c0_88, %c0_89], %159 {strides = array<i32>} : memref<16x128xf32, #tpu.memory_space<vmem>>, vector<16x128xf32>,
      %cst_90 = arith.constant 0.000000e+00 : f32
      %161 = vector.broadcast %cst_90 : f32 to vector<16x128xf32>
      %c0_91 = arith.constant 0 : index
      %c0_92 = arith.constant 0 : index
      %162 = vector.load %arg7[%c0_91, %c0_92] : memref<16x128xf32, #tpu.memory_space<vmem>>, vector<16x128xf32>
      tpu.vector_store %arg7[%c0_91, %c0_92], %161 {strides = array<i32>} : memref<16x128xf32, #tpu.memory_space<vmem>>, vector<16x128xf32>,
    } else {
    }
    %c0 = arith.constant 0 : index
    %c0_1 = arith.constant 0 : index
    %c0_2 = arith.constant 0 : index
    %3 = vector.load %arg3[%c0, %c0_1, %c0_2] : memref<8x16x128xbf16, #tpu.memory_space<vmem>>, vector<8x16x128xbf16>
    %4 = vector.shape_cast %3 : vector<8x16x128xbf16> to vector<128x128xbf16>
    %c0_3 = arith.constant 0 : index
    %c0_4 = arith.constant 0 : index
    %5 = vector.load %arg4[%c0_3, %c0_4] : memref<128x128xbf16, #tpu.memory_space<vmem>>, vector<128x128xbf16>
    %cst = arith.constant dense<0.000000e+00> : vector<128x128xf32>
    %6 = tpu.matmul %4, %5, %cst {dimension_numbers = #tpu.dot_dimension_numbers<[1], [0], [0], [1], [0, 0, 1, 1], [], []>} : vector<128x128xbf16>, vector<128x128xbf16>, vector<128x128xf32> -> vector<128x128xf32>
    %c0_5 = arith.constant 0 : index
    %c0_6 = arith.constant 0 : index
    %7 = vector.load %arg5[%c0_5, %c0_6] : memref<1x128xf32, #tpu.memory_space<vmem>>, vector<1x128xf32>
    %8 = vector.broadcast %7 : vector<1x128xf32> to vector<128x128xf32>
    %9 = arith.addf %6, %8 : vector<128x128xf32>
    %10 = vector.shape_cast %9 : vector<128x128xf32> to vector<8x16x128xf32>
    %11 = arith.truncf %10 : vector<8x16x128xf32> to vector<8x16x128xbf16>
    %c0_7 = arith.constant 0 : index
    %c0_8 = arith.constant 0 : index
    %c0_9 = arith.constant 0 : index
    %12 = vector.load %arg6[%c0_7, %c0_8, %c0_9] : memref<8x16x128xbf16, #tpu.memory_space<vmem>>, vector<8x16x128xbf16>
    tpu.vector_store %arg6[%c0_7, %c0_8, %c0_9], %11 {strides = array<i32>} : memref<8x16x128xbf16, #tpu.memory_space<vmem>>, vector<8x16x128xbf16>,
    %c0_10 = arith.constant 0 : index
    %c0_11 = arith.constant 0 : index
    %13 = vector.load %arg8[%c0_10, %c0_11] : memref<16x128xf32, #tpu.memory_space<vmem>>, vector<16x128xf32>
    %c0_i32_12 = arith.constant 0 : i32
    %14 = arith.index_cast %c0_i32_12 : i32 to index
    %c0_13 = arith.constant 0 : index
    %c0_14 = arith.constant 0 : index
    %15 = vector.load %arg6[%14, %c0_13, %c0_14] : memref<8x16x128xbf16, #tpu.memory_space<vmem>>, vector<1x16x128xbf16>
    %16 = vector.shape_cast %15 : vector<1x16x128xbf16> to vector<16x128xbf16>
    %17 = arith.extf %16 : vector<16x128xbf16> to vector<16x128xf32>
    %18 = arith.addf %13, %17 : vector<16x128xf32>
    %cst_15 = arith.constant 1.000000e+00 : f32
    %19 = vector.broadcast %cst_15 : f32 to vector<16x128xf32>
    %20 = arith.cmpf oge, %18, %19 : vector<16x128xf32>
    %21 = arith.extui %20 : vector<16x128xi1> to vector<16x128xi32>
    %22 = arith.sitofp %21 : vector<16x128xi32> to vector<16x128xf32>
    %23 = arith.truncf %22 : vector<16x128xf32> to vector<16x128xbf16>
    %24 = arith.index_cast %c0_i32_12 : i32 to index
    %c0_16 = arith.constant 0 : index
    %c0_17 = arith.constant 0 : index
    %25 = vector.load %arg6[%24, %c0_16, %c0_17] : memref<8x16x128xbf16, #tpu.memory_space<vmem>>, vector<1x16x128xbf16>
    %26 = vector.shape_cast %25 : vector<1x16x128xbf16> to vector<16x128xbf16>
    %27 = vector.shape_cast %23 : vector<16x128xbf16> to vector<1x16x128xbf16>
    tpu.vector_store %arg6[%24, %c0_16, %c0_17], %27 {strides = array<i32>} : memref<8x16x128xbf16, #tpu.memory_space<vmem>>, vector<1x16x128xbf16>,
    %c0_18 = arith.constant 0 : index
    %c0_19 = arith.constant 0 : index
    %28 = vector.load %arg7[%c0_18, %c0_19] : memref<16x128xf32, #tpu.memory_space<vmem>>, vector<16x128xf32>
    %29 = arith.addf %28, %22 : vector<16x128xf32>
    %c0_20 = arith.constant 0 : index
    %c0_21 = arith.constant 0 : index
    %30 = vector.load %arg7[%c0_20, %c0_21] : memref<16x128xf32, #tpu.memory_space<vmem>>, vector<16x128xf32>
    tpu.vector_store %arg7[%c0_20, %c0_21], %29 {strides = array<i32>} : memref<16x128xf32, #tpu.memory_space<vmem>>, vector<16x128xf32>,
    %31 = arith.subf %18, %22 : vector<16x128xf32>
    %c1_i32 = arith.constant 1 : i32
    %32 = arith.index_cast %c1_i32 : i32 to index
    %c0_22 = arith.constant 0 : index
    %c0_23 = arith.constant 0 : index
    %33 = vector.load %arg6[%32, %c0_22, %c0_23] : memref<8x16x128xbf16, #tpu.memory_space<vmem>>, vector<1x16x128xbf16>
    %34 = vector.shape_cast %33 : vector<1x16x128xbf16> to vector<16x128xbf16>
    %35 = arith.extf %34 : vector<16x128xbf16> to vector<16x128xf32>
    %36 = arith.addf %31, %35 : vector<16x128xf32>
    %cst_24 = arith.constant 1.000000e+00 : f32
    %37 = vector.broadcast %cst_24 : f32 to vector<16x128xf32>
    %38 = arith.cmpf oge, %36, %37 : vector<16x128xf32>
    %39 = arith.extui %38 : vector<16x128xi1> to vector<16x128xi32>
    %40 = arith.sitofp %39 : vector<16x128xi32> to vector<16x128xf32>
    %41 = arith.truncf %40 : vector<16x128xf32> to vector<16x128xbf16>
    %42 = arith.index_cast %c1_i32 : i32 to index
    %c0_25 = arith.constant 0 : index
    %c0_26 = arith.constant 0 : index
    %43 = vector.load %arg6[%42, %c0_25, %c0_26] : memref<8x16x128xbf16, #tpu.memory_space<vmem>>, vector<1x16x128xbf16>
    %44 = vector.shape_cast %43 : vector<1x16x128xbf16> to vector<16x128xbf16>
    %45 = vector.shape_cast %41 : vector<16x128xbf16> to vector<1x16x128xbf16>
    tpu.vector_store %arg6[%42, %c0_25, %c0_26], %45 {strides = array<i32>} : memref<8x16x128xbf16, #tpu.memory_space<vmem>>, vector<1x16x128xbf16>,
    %c0_27 = arith.constant 0 : index
    %c0_28 = arith.constant 0 : index
    %46 = vector.load %arg7[%c0_27, %c0_28] : memref<16x128xf32, #tpu.memory_space<vmem>>, vector<16x128xf32>
    %47 = arith.addf %46, %40 : vector<16x128xf32>
    %c0_29 = arith.constant 0 : index
    %c0_30 = arith.constant 0 : index
    %48 = vector.load %arg7[%c0_29, %c0_30] : memref<16x128xf32, #tpu.memory_space<vmem>>, vector<16x128xf32>
    tpu.vector_store %arg7[%c0_29, %c0_30], %47 {strides = array<i32>} : memref<16x128xf32, #tpu.memory_space<vmem>>, vector<16x128xf32>,
    %49 = arith.subf %36, %40 : vector<16x128xf32>
    %c2_i32 = arith.constant 2 : i32
    %50 = arith.index_cast %c2_i32 : i32 to index
    %c0_31 = arith.constant 0 : index
    %c0_32 = arith.constant 0 : index
    %51 = vector.load %arg6[%50, %c0_31, %c0_32] : memref<8x16x128xbf16, #tpu.memory_space<vmem>>, vector<1x16x128xbf16>
    %52 = vector.shape_cast %51 : vector<1x16x128xbf16> to vector<16x128xbf16>
    %53 = arith.extf %52 : vector<16x128xbf16> to vector<16x128xf32>
    %54 = arith.addf %49, %53 : vector<16x128xf32>
    %cst_33 = arith.constant 1.000000e+00 : f32
    %55 = vector.broadcast %cst_33 : f32 to vector<16x128xf32>
    %56 = arith.cmpf oge, %54, %55 : vector<16x128xf32>
    %57 = arith.extui %56 : vector<16x128xi1> to vector<16x128xi32>
    %58 = arith.sitofp %57 : vector<16x128xi32> to vector<16x128xf32>
    %59 = arith.truncf %58 : vector<16x128xf32> to vector<16x128xbf16>
    %60 = arith.index_cast %c2_i32 : i32 to index
    %c0_34 = arith.constant 0 : index
    %c0_35 = arith.constant 0 : index
    %61 = vector.load %arg6[%60, %c0_34, %c0_35] : memref<8x16x128xbf16, #tpu.memory_space<vmem>>, vector<1x16x128xbf16>
    %62 = vector.shape_cast %61 : vector<1x16x128xbf16> to vector<16x128xbf16>
    %63 = vector.shape_cast %59 : vector<16x128xbf16> to vector<1x16x128xbf16>
    tpu.vector_store %arg6[%60, %c0_34, %c0_35], %63 {strides = array<i32>} : memref<8x16x128xbf16, #tpu.memory_space<vmem>>, vector<1x16x128xbf16>,
    %c0_36 = arith.constant 0 : index
    %c0_37 = arith.constant 0 : index
    %64 = vector.load %arg7[%c0_36, %c0_37] : memref<16x128xf32, #tpu.memory_space<vmem>>, vector<16x128xf32>
    %65 = arith.addf %64, %58 : vector<16x128xf32>
    %c0_38 = arith.constant 0 : index
    %c0_39 = arith.constant 0 : index
    %66 = vector.load %arg7[%c0_38, %c0_39] : memref<16x128xf32, #tpu.memory_space<vmem>>, vector<16x128xf32>
    tpu.vector_store %arg7[%c0_38, %c0_39], %65 {strides = array<i32>} : memref<16x128xf32, #tpu.memory_space<vmem>>, vector<16x128xf32>,
    %67 = arith.subf %54, %58 : vector<16x128xf32>
    %c3_i32 = arith.constant 3 : i32
    %68 = arith.index_cast %c3_i32 : i32 to index
    %c0_40 = arith.constant 0 : index
    %c0_41 = arith.constant 0 : index
    %69 = vector.load %arg6[%68, %c0_40, %c0_41] : memref<8x16x128xbf16, #tpu.memory_space<vmem>>, vector<1x16x128xbf16>
    %70 = vector.shape_cast %69 : vector<1x16x128xbf16> to vector<16x128xbf16>
    %71 = arith.extf %70 : vector<16x128xbf16> to vector<16x128xf32>
    %72 = arith.addf %67, %71 : vector<16x128xf32>
    %cst_42 = arith.constant 1.000000e+00 : f32
    %73 = vector.broadcast %cst_42 : f32 to vector<16x128xf32>
    %74 = arith.cmpf oge, %72, %73 : vector<16x128xf32>
    %75 = arith.extui %74 : vector<16x128xi1> to vector<16x128xi32>
    %76 = arith.sitofp %75 : vector<16x128xi32> to vector<16x128xf32>
    %77 = arith.truncf %76 : vector<16x128xf32> to vector<16x128xbf16>
    %78 = arith.index_cast %c3_i32 : i32 to index
    %c0_43 = arith.constant 0 : index
    %c0_44 = arith.constant 0 : index
    %79 = vector.load %arg6[%78, %c0_43, %c0_44] : memref<8x16x128xbf16, #tpu.memory_space<vmem>>, vector<1x16x128xbf16>
    %80 = vector.shape_cast %79 : vector<1x16x128xbf16> to vector<16x128xbf16>
    %81 = vector.shape_cast %77 : vector<16x128xbf16> to vector<1x16x128xbf16>
    tpu.vector_store %arg6[%78, %c0_43, %c0_44], %81 {strides = array<i32>} : memref<8x16x128xbf16, #tpu.memory_space<vmem>>, vector<1x16x128xbf16>,
    %c0_45 = arith.constant 0 : index
    %c0_46 = arith.constant 0 : index
    %82 = vector.load %arg7[%c0_45, %c0_46] : memref<16x128xf32, #tpu.memory_space<vmem>>, vector<16x128xf32>
    %83 = arith.addf %82, %76 : vector<16x128xf32>
    %c0_47 = arith.constant 0 : index
    %c0_48 = arith.constant 0 : index
    %84 = vector.load %arg7[%c0_47, %c0_48] : memref<16x128xf32, #tpu.memory_space<vmem>>, vector<16x128xf32>
    tpu.vector_store %arg7[%c0_47, %c0_48], %83 {strides = array<i32>} : memref<16x128xf32, #tpu.memory_space<vmem>>, vector<16x128xf32>,
    %85 = arith.subf %72, %76 : vector<16x128xf32>
    %c4_i32 = arith.constant 4 : i32
    %86 = arith.index_cast %c4_i32 : i32 to index
    %c0_49 = arith.constant 0 : index
    %c0_50 = arith.constant 0 : index
    %87 = vector.load %arg6[%86, %c0_49, %c0_50] : memref<8x16x128xbf16, #tpu.memory_space<vmem>>, vector<1x16x128xbf16>
    %88 = vector.shape_cast %87 : vector<1x16x128xbf16> to vector<16x128xbf16>
    %89 = arith.extf %88 : vector<16x128xbf16> to vector<16x128xf32>
    %90 = arith.addf %85, %89 : vector<16x128xf32>
    %cst_51 = arith.constant 1.000000e+00 : f32
    %91 = vector.broadcast %cst_51 : f32 to vector<16x128xf32>
    %92 = arith.cmpf oge, %90, %91 : vector<16x128xf32>
    %93 = arith.extui %92 : vector<16x128xi1> to vector<16x128xi32>
    %94 = arith.sitofp %93 : vector<16x128xi32> to vector<16x128xf32>
    %95 = arith.truncf %94 : vector<16x128xf32> to vector<16x128xbf16>
    %96 = arith.index_cast %c4_i32 : i32 to index
    %c0_52 = arith.constant 0 : index
    %c0_53 = arith.constant 0 : index
    %97 = vector.load %arg6[%96, %c0_52, %c0_53] : memref<8x16x128xbf16, #tpu.memory_space<vmem>>, vector<1x16x128xbf16>
    %98 = vector.shape_cast %97 : vector<1x16x128xbf16> to vector<16x128xbf16>
    %99 = vector.shape_cast %95 : vector<16x128xbf16> to vector<1x16x128xbf16>
    tpu.vector_store %arg6[%96, %c0_52, %c0_53], %99 {strides = array<i32>} : memref<8x16x128xbf16, #tpu.memory_space<vmem>>, vector<1x16x128xbf16>,
    %c0_54 = arith.constant 0 : index
    %c0_55 = arith.constant 0 : index
    %100 = vector.load %arg7[%c0_54, %c0_55] : memref<16x128xf32, #tpu.memory_space<vmem>>, vector<16x128xf32>
    %101 = arith.addf %100, %94 : vector<16x128xf32>
    %c0_56 = arith.constant 0 : index
    %c0_57 = arith.constant 0 : index
    %102 = vector.load %arg7[%c0_56, %c0_57] : memref<16x128xf32, #tpu.memory_space<vmem>>, vector<16x128xf32>
    tpu.vector_store %arg7[%c0_56, %c0_57], %101 {strides = array<i32>} : memref<16x128xf32, #tpu.memory_space<vmem>>, vector<16x128xf32>,
    %103 = arith.subf %90, %94 : vector<16x128xf32>
    %c5_i32 = arith.constant 5 : i32
    %104 = arith.index_cast %c5_i32 : i32 to index
    %c0_58 = arith.constant 0 : index
    %c0_59 = arith.constant 0 : index
    %105 = vector.load %arg6[%104, %c0_58, %c0_59] : memref<8x16x128xbf16, #tpu.memory_space<vmem>>, vector<1x16x128xbf16>
    %106 = vector.shape_cast %105 : vector<1x16x128xbf16> to vector<16x128xbf16>
    %107 = arith.extf %106 : vector<16x128xbf16> to vector<16x128xf32>
    %108 = arith.addf %103, %107 : vector<16x128xf32>
    %cst_60 = arith.constant 1.000000e+00 : f32
    %109 = vector.broadcast %cst_60 : f32 to vector<16x128xf32>
    %110 = arith.cmpf oge, %108, %109 : vector<16x128xf32>
    %111 = arith.extui %110 : vector<16x128xi1> to vector<16x128xi32>
    %112 = arith.sitofp %111 : vector<16x128xi32> to vector<16x128xf32>
    %113 = arith.truncf %112 : vector<16x128xf32> to vector<16x128xbf16>
    %114 = arith.index_cast %c5_i32 : i32 to index
    %c0_61 = arith.constant 0 : index
    %c0_62 = arith.constant 0 : index
    %115 = vector.load %arg6[%114, %c0_61, %c0_62] : memref<8x16x128xbf16, #tpu.memory_space<vmem>>, vector<1x16x128xbf16>
    %116 = vector.shape_cast %115 : vector<1x16x128xbf16> to vector<16x128xbf16>
    %117 = vector.shape_cast %113 : vector<16x128xbf16> to vector<1x16x128xbf16>
    tpu.vector_store %arg6[%114, %c0_61, %c0_62], %117 {strides = array<i32>} : memref<8x16x128xbf16, #tpu.memory_space<vmem>>, vector<1x16x128xbf16>,
    %c0_63 = arith.constant 0 : index
    %c0_64 = arith.constant 0 : index
    %118 = vector.load %arg7[%c0_63, %c0_64] : memref<16x128xf32, #tpu.memory_space<vmem>>, vector<16x128xf32>
    %119 = arith.addf %118, %112 : vector<16x128xf32>
    %c0_65 = arith.constant 0 : index
    %c0_66 = arith.constant 0 : index
    %120 = vector.load %arg7[%c0_65, %c0_66] : memref<16x128xf32, #tpu.memory_space<vmem>>, vector<16x128xf32>
    tpu.vector_store %arg7[%c0_65, %c0_66], %119 {strides = array<i32>} : memref<16x128xf32, #tpu.memory_space<vmem>>, vector<16x128xf32>,
    %121 = arith.subf %108, %112 : vector<16x128xf32>
    %c6_i32 = arith.constant 6 : i32
    %122 = arith.index_cast %c6_i32 : i32 to index
    %c0_67 = arith.constant 0 : index
    %c0_68 = arith.constant 0 : index
    %123 = vector.load %arg6[%122, %c0_67, %c0_68] : memref<8x16x128xbf16, #tpu.memory_space<vmem>>, vector<1x16x128xbf16>
    %124 = vector.shape_cast %123 : vector<1x16x128xbf16> to vector<16x128xbf16>
    %125 = arith.extf %124 : vector<16x128xbf16> to vector<16x128xf32>
    %126 = arith.addf %121, %125 : vector<16x128xf32>
    %cst_69 = arith.constant 1.000000e+00 : f32
    %127 = vector.broadcast %cst_69 : f32 to vector<16x128xf32>
    %128 = arith.cmpf oge, %126, %127 : vector<16x128xf32>
    %129 = arith.extui %128 : vector<16x128xi1> to vector<16x128xi32>
    %130 = arith.sitofp %129 : vector<16x128xi32> to vector<16x128xf32>
    %131 = arith.truncf %130 : vector<16x128xf32> to vector<16x128xbf16>
    %132 = arith.index_cast %c6_i32 : i32 to index
    %c0_70 = arith.constant 0 : index
    %c0_71 = arith.constant 0 : index
    %133 = vector.load %arg6[%132, %c0_70, %c0_71] : memref<8x16x128xbf16, #tpu.memory_space<vmem>>, vector<1x16x128xbf16>
    %134 = vector.shape_cast %133 : vector<1x16x128xbf16> to vector<16x128xbf16>
    %135 = vector.shape_cast %131 : vector<16x128xbf16> to vector<1x16x128xbf16>
    tpu.vector_store %arg6[%132, %c0_70, %c0_71], %135 {strides = array<i32>} : memref<8x16x128xbf16, #tpu.memory_space<vmem>>, vector<1x16x128xbf16>,
    %c0_72 = arith.constant 0 : index
    %c0_73 = arith.constant 0 : index
    %136 = vector.load %arg7[%c0_72, %c0_73] : memref<16x128xf32, #tpu.memory_space<vmem>>, vector<16x128xf32>
    %137 = arith.addf %136, %130 : vector<16x128xf32>
    %c0_74 = arith.constant 0 : index
    %c0_75 = arith.constant 0 : index
    %138 = vector.load %arg7[%c0_74, %c0_75] : memref<16x128xf32, #tpu.memory_space<vmem>>, vector<16x128xf32>
    tpu.vector_store %arg7[%c0_74, %c0_75], %137 {strides = array<i32>} : memref<16x128xf32, #tpu.memory_space<vmem>>, vector<16x128xf32>,
    %139 = arith.subf %126, %130 : vector<16x128xf32>
    %c7_i32 = arith.constant 7 : i32
    %140 = arith.index_cast %c7_i32 : i32 to index
    %c0_76 = arith.constant 0 : index
    %c0_77 = arith.constant 0 : index
    %141 = vector.load %arg6[%140, %c0_76, %c0_77] : memref<8x16x128xbf16, #tpu.memory_space<vmem>>, vector<1x16x128xbf16>
    %142 = vector.shape_cast %141 : vector<1x16x128xbf16> to vector<16x128xbf16>
    %143 = arith.extf %142 : vector<16x128xbf16> to vector<16x128xf32>
    %144 = arith.addf %139, %143 : vector<16x128xf32>
    %cst_78 = arith.constant 1.000000e+00 : f32
    %145 = vector.broadcast %cst_78 : f32 to vector<16x128xf32>
    %146 = arith.cmpf oge, %144, %145 : vector<16x128xf32>
    %147 = arith.extui %146 : vector<16x128xi1> to vector<16x128xi32>
    %148 = arith.sitofp %147 : vector<16x128xi32> to vector<16x128xf32>
    %149 = arith.truncf %148 : vector<16x128xf32> to vector<16x128xbf16>
    %150 = arith.index_cast %c7_i32 : i32 to index
    %c0_79 = arith.constant 0 : index
    %c0_80 = arith.constant 0 : index
    %151 = vector.load %arg6[%150, %c0_79, %c0_80] : memref<8x16x128xbf16, #tpu.memory_space<vmem>>, vector<1x16x128xbf16>
    %152 = vector.shape_cast %151 : vector<1x16x128xbf16> to vector<16x128xbf16>
    %153 = vector.shape_cast %149 : vector<16x128xbf16> to vector<1x16x128xbf16>
    tpu.vector_store %arg6[%150, %c0_79, %c0_80], %153 {strides = array<i32>} : memref<8x16x128xbf16, #tpu.memory_space<vmem>>, vector<1x16x128xbf16>,
    %c0_81 = arith.constant 0 : index
    %c0_82 = arith.constant 0 : index
    %154 = vector.load %arg7[%c0_81, %c0_82] : memref<16x128xf32, #tpu.memory_space<vmem>>, vector<16x128xf32>
    %155 = arith.addf %154, %148 : vector<16x128xf32>
    %c0_83 = arith.constant 0 : index
    %c0_84 = arith.constant 0 : index
    %156 = vector.load %arg7[%c0_83, %c0_84] : memref<16x128xf32, #tpu.memory_space<vmem>>, vector<16x128xf32>
    tpu.vector_store %arg7[%c0_83, %c0_84], %155 {strides = array<i32>} : memref<16x128xf32, #tpu.memory_space<vmem>>, vector<16x128xf32>,
    %157 = arith.subf %144, %148 : vector<16x128xf32>
    %c8_i32 = arith.constant 8 : i32
    %c0_85 = arith.constant 0 : index
    %c0_86 = arith.constant 0 : index
    %158 = vector.load %arg8[%c0_85, %c0_86] : memref<16x128xf32, #tpu.memory_space<vmem>>, vector<16x128xf32>
    tpu.vector_store %arg8[%c0_85, %c0_86], %157 {strides = array<i32>} : memref<16x128xf32, #tpu.memory_space<vmem>>, vector<16x128xf32>,
    return
  }
  func.func @transform_0(%arg0: i32, %arg1: i32, %arg2: i32) -> (i32, i32, i32) {
    %c0_i32 = arith.constant 0 : i32
    %c0_i32_0 = arith.constant 0 : i32
    return %arg2, %arg0, %c0_i32 : i32, i32, i32
  }
  func.func @transform_1(%arg0: i32, %arg1: i32, %arg2: i32) -> (i32, i32) {
    %c0_i32 = arith.constant 0 : i32
    %c0_i32_0 = arith.constant 0 : i32
    return %c0_i32, %arg1 : i32, i32
  }
  func.func @transform_2(%arg0: i32, %arg1: i32, %arg2: i32) -> (i32, i32) {
    %c0_i32 = arith.constant 0 : i32
    %c0_i32_0 = arith.constant 0 : i32
    return %c0_i32, %arg1 : i32, i32
  }
  func.func @transform_3(%arg0: i32, %arg1: i32, %arg2: i32) -> (i32, i32, i32) {
    %c0_i32 = arith.constant 0 : i32
    return %arg2, %arg0, %arg1 : i32, i32, i32
  }
  func.func @transform_4(%arg0: i32, %arg1: i32, %arg2: i32) -> (i32, i32) {
    %c0_i32 = arith.constant 0 : i32
    return %arg0, %arg1 : i32, i32
  }
}

module attributes {stable_mosaic.version = 11 : i64} {
  func.func @_linear_if_kernel(%arg0: i32, %arg1: i32, %arg2: i32, %arg3: memref<8x16x128xbf16, #tpu.memory_space<vmem>>, %arg4: memref<128x128xbf16, #tpu.memory_space<vmem>>, %arg5: memref<1x128xf32, #tpu.memory_space<vmem>>, %arg6: memref<8x16x128xbf16, #tpu.memory_space<vmem>>, %arg7: memref<16x128xf32, #tpu.memory_space<vmem>>, %arg8: memref<16x128xf32, #tpu.memory_space<vmem>>) attributes {dimension_semantics = [#tpu.dimension_semantics<parallel>, #tpu.dimension_semantics<parallel>, #tpu.dimension_semantics<arbitrary>], iteration_bounds = array<i64: 1, 1, 1>, scalar_prefetch = 0 : i64, scratch_operands = 1 : i64, tpu.core_type = #tpu.core_type<tc>, window_params = [{transform_indices = @transform_0, window_bounds = array<i64: 8, 16, 128>}, {transform_indices = @transform_1, window_bounds = array<i64: 128, 128>}, {transform_indices = @transform_2, window_bounds = array<i64: 1, 128>}, {transform_indices = @transform_3, window_bounds = array<i64: 8, 16, 128>}, {transform_indices = @transform_4, window_bounds = array<i64: 16, 128>}]} {
    %c0_i32 = arith.constant 0 : i32
    %0 = arith.cmpi eq, %arg2, %c0_i32 : i32
    %1 = arith.extui %0 : i1 to i32
    %c0_i32_0 = arith.constant 0 : i32
    %2 = arith.cmpi ne, %1, %c0_i32_0 : i32
    scf.if %2 {
      %cst_87 = arith.constant 0.000000e+00 : f32
      %159 = vector.broadcast %cst_87 : f32 to vector<16x128xf32>
      %c0_88 = arith.constant 0 : index
      %c0_89 = arith.constant 0 : index
      %160 = vector.load %arg8[%c0_88, %c0_89] : memref<16x128xf32, #tpu.memory_space<vmem>>, vector<16x128xf32>
      tpu.vector_store %arg8[%c0_88, %c0_89], %159 {strides = array<i32>} : memref<16x128xf32, #tpu.memory_space<vmem>>, vector<16x128xf32>,
      %cst_90 = arith.constant 0.000000e+00 : f32
      %161 = vector.broadcast %cst_90 : f32 to vector<16x128xf32>
      %c0_91 = arith.constant 0 : index
      %c0_92 = arith.constant 0 : index
      %162 = vector.load %arg7[%c0_91, %c0_92] : memref<16x128xf32, #tpu.memory_space<vmem>>, vector<16x128xf32>
      tpu.vector_store %arg7[%c0_91, %c0_92], %161 {strides = array<i32>} : memref<16x128xf32, #tpu.memory_space<vmem>>, vector<16x128xf32>,
    } else {
    }
    %c0 = arith.constant 0 : index
    %c0_1 = arith.constant 0 : index
    %c0_2 = arith.constant 0 : index
    %3 = vector.load %arg3[%c0, %c0_1, %c0_2] : memref<8x16x128xbf16, #tpu.memory_space<vmem>>, vector<8x16x128xbf16>
    %4 = vector.shape_cast %3 : vector<8x16x128xbf16> to vector<128x128xbf16>
    %c0_3 = arith.constant 0 : index
    %c0_4 = arith.constant 0 : index
    %5 = vector.load %arg4[%c0_3, %c0_4] : memref<128x128xbf16, #tpu.memory_space<vmem>>, vector<128x128xbf16>
    %cst = arith.constant dense<0.000000e+00> : vector<128x128xf32>
    %6 = tpu.matmul %4, %5, %cst {dimension_numbers = #tpu.dot_dimension_numbers<[1], [0], [0], [1], [0, 0, 1, 1], [], []>} : vector<128x128xbf16>, vector<128x128xbf16>, vector<128x128xf32> -> vector<128x128xf32>
    %c0_5 = arith.constant 0 : index
    %c0_6 = arith.constant 0 : index
    %7 = vector.load %arg5[%c0_5, %c0_6] : memref<1x128xf32, #tpu.memory_space<vmem>>, vector<1x128xf32>
    %8 = vector.broadcast %7 : vector<1x128xf32> to vector<128x128xf32>
    %9 = arith.addf %6, %8 : vector<128x128xf32>
    %10 = vector.shape_cast %9 : vector<128x128xf32> to vector<8x16x128xf32>
    %11 = arith.truncf %10 : vector<8x16x128xf32> to vector<8x16x128xbf16>
    %c0_7 = arith.constant 0 : index
    %c0_8 = arith.constant 0 : index
    %c0_9 = arith.constant 0 : index
    %12 = vector.load %arg6[%c0_7, %c0_8, %c0_9] : memref<8x16x128xbf16, #tpu.memory_space<vmem>>, vector<8x16x128xbf16>
    tpu.vector_store %arg6[%c0_7, %c0_8, %c0_9], %11 {strides = array<i32>} : memref<8x16x128xbf16, #tpu.memory_space<vmem>>, vector<8x16x128xbf16>,
    %c0_10 = arith.constant 0 : index
    %c0_11 = arith.constant 0 : index
    %13 = vector.load %arg8[%c0_10, %c0_11] : memref<16x128xf32, #tpu.memory_space<vmem>>, vector<16x128xf32>
    %c0_i32_12 = arith.constant 0 : i32
    %14 = arith.index_cast %c0_i32_12 : i32 to index
    %c0_13 = arith.constant 0 : index
    %c0_14 = arith.constant 0 : index
    %15 = vector.load %arg6[%14, %c0_13, %c0_14] : memref<8x16x128xbf16, #tpu.memory_space<vmem>>, vector<1x16x128xbf16>
    %16 = vector.shape_cast %15 : vector<1x16x128xbf16> to vector<16x128xbf16>
    %17 = arith.extf %16 : vector<16x128xbf16> to vector<16x128xf32>
    %18 = arith.addf %13, %17 : vector<16x128xf32>
    %cst_15 = arith.constant 1.000000e+00 : f32
    %19 = vector.broadcast %cst_15 : f32 to vector<16x128xf32>
    %20 = arith.cmpf oge, %18, %19 : vector<16x128xf32>
    %21 = arith.extui %20 : vector<16x128xi1> to vector<16x128xi32>
    %22 = arith.sitofp %21 : vector<16x128xi32> to vector<16x128xf32>
    %23 = arith.truncf %22 : vector<16x128xf32> to vector<16x128xbf16>
    %24 = arith.index_cast %c0_i32_12 : i32 to index
    %c0_16 = arith.constant 0 : index
    %c0_17 = arith.constant 0 : index
    %25 = vector.load %arg6[%24, %c0_16, %c0_17] : memref<8x16x128xbf16, #tpu.memory_space<vmem>>, vector<1x16x128xbf16>
    %26 = vector.shape_cast %25 : vector<1x16x128xbf16> to vector<16x128xbf16>
    %27 = vector.shape_cast %23 : vector<16x128xbf16> to vector<1x16x128xbf16>
    tpu.vector_store %arg6[%24, %c0_16, %c0_17], %27 {strides = array<i32>} : memref<8x16x128xbf16, #tpu.memory_space<vmem>>, vector<1x16x128xbf16>,
    %c0_18 = arith.constant 0 : index
    %c0_19 = arith.constant 0 : index
    %28 = vector.load %arg7[%c0_18, %c0_19] : memref<16x128xf32, #tpu.memory_space<vmem>>, vector<16x128xf32>
    %29 = arith.addf %28, %22 : vector<16x128xf32>
    %c0_20 = arith.constant 0 : index
    %c0_21 = arith.constant 0 : index
    %30 = vector.load %arg7[%c0_20, %c0_21] : memref<16x128xf32, #tpu.memory_space<vmem>>, vector<16x128xf32>
    tpu.vector_store %arg7[%c0_20, %c0_21], %29 {strides = array<i32>} : memref<16x128xf32, #tpu.memory_space<vmem>>, vector<16x128xf32>,
    %31 = arith.subf %18, %22 : vector<16x128xf32>
    %c1_i32 = arith.constant 1 : i32
    %32 = arith.index_cast %c1_i32 : i32 to index
    %c0_22 = arith.constant 0 : index
    %c0_23 = arith.constant 0 : index
    %33 = vector.load %arg6[%32, %c0_22, %c0_23] : memref<8x16x128xbf16, #tpu.memory_space<vmem>>, vector<1x16x128xbf16>
    %34 = vector.shape_cast %33 : vector<1x16x128xbf16> to vector<16x128xbf16>
    %35 = arith.extf %34 : vector<16x128xbf16> to vector<16x128xf32>
    %36 = arith.addf %31, %35 : vector<16x128xf32>
    %cst_24 = arith.constant 1.000000e+00 : f32
    %37 = vector.broadcast %cst_24 : f32 to vector<16x128xf32>
    %38 = arith.cmpf oge, %36, %37 : vector<16x128xf32>
    %39 = arith.extui %38 : vector<16x128xi1> to vector<16x128xi32>
    %40 = arith.sitofp %39 : vector<16x128xi32> to vector<16x128xf32>
    %41 = arith.truncf %40 : vector<16x128xf32> to vector<16x128xbf16>
    %42 = arith.index_cast %c1_i32 : i32 to index
    %c0_25 = arith.constant 0 : index
    %c0_26 = arith.constant 0 : index
    %43 = vector.load %arg6[%42, %c0_25, %c0_26] : memref<8x16x128xbf16, #tpu.memory_space<vmem>>, vector<1x16x128xbf16>
    %44 = vector.shape_cast %43 : vector<1x16x128xbf16> to vector<16x128xbf16>
    %45 = vector.shape_cast %41 : vector<16x128xbf16> to vector<1x16x128xbf16>
    tpu.vector_store %arg6[%42, %c0_25, %c0_26], %45 {strides = array<i32>} : memref<8x16x128xbf16, #tpu.memory_space<vmem>>, vector<1x16x128xbf16>,
    %c0_27 = arith.constant 0 : index
    %c0_28 = arith.constant 0 : index
    %46 = vector.load %arg7[%c0_27, %c0_28] : memref<16x128xf32, #tpu.memory_space<vmem>>, vector<16x128xf32>
    %47 = arith.addf %46, %40 : vector<16x128xf32>
    %c0_29 = arith.constant 0 : index
    %c0_30 = arith.constant 0 : index
    %48 = vector.load %arg7[%c0_29, %c0_30] : memref<16x128xf32, #tpu.memory_space<vmem>>, vector<16x128xf32>
    tpu.vector_store %arg7[%c0_29, %c0_30], %47 {strides = array<i32>} : memref<16x128xf32, #tpu.memory_space<vmem>>, vector<16x128xf32>,
    %49 = arith.subf %36, %40 : vector<16x128xf32>
    %c2_i32 = arith.constant 2 : i32
    %50 = arith.index_cast %c2_i32 : i32 to index
    %c0_31 = arith.constant 0 : index
    %c0_32 = arith.constant 0 : index
    %51 = vector.load %arg6[%50, %c0_31, %c0_32] : memref<8x16x128xbf16, #tpu.memory_space<vmem>>, vector<1x16x128xbf16>
    %52 = vector.shape_cast %51 : vector<1x16x128xbf16> to vector<16x128xbf16>
    %53 = arith.extf %52 : vector<16x128xbf16> to vector<16x128xf32>
    %54 = arith.addf %49, %53 : vector<16x128xf32>
    %cst_33 = arith.constant 1.000000e+00 : f32
    %55 = vector.broadcast %cst_33 : f32 to vector<16x128xf32>
    %56 = arith.cmpf oge, %54, %55 : vector<16x128xf32>
    %57 = arith.extui %56 : vector<16x128xi1> to vector<16x128xi32>
    %58 = arith.sitofp %57 : vector<16x128xi32> to vector<16x128xf32>
    %59 = arith.truncf %58 : vector<16x128xf32> to vector<16x128xbf16>
    %60 = arith.index_cast %c2_i32 : i32 to index
    %c0_34 = arith.constant 0 : index
    %c0_35 = arith.constant 0 : index
    %61 = vector.load %arg6[%60, %c0_34, %c0_35] : memref<8x16x128xbf16, #tpu.memory_space<vmem>>, vector<1x16x128xbf16>
    %62 = vector.shape_cast %61 : vector<1x16x128xbf16> to vector<16x128xbf16>
    %63 = vector.shape_cast %59 : vector<16x128xbf16> to vector<1x16x128xbf16>
    tpu.vector_store %arg6[%60, %c0_34, %c0_35], %63 {strides = array<i32>} : memref<8x16x128xbf16, #tpu.memory_space<vmem>>, vector<1x16x128xbf16>,
    %c0_36 = arith.constant 0 : index
    %c0_37 = arith.constant 0 : index
    %64 = vector.load %arg7[%c0_36, %c0_37] : memref<16x128xf32, #tpu.memory_space<vmem>>, vector<16x128xf32>
    %65 = arith.addf %64, %58 : vector<16x128xf32>
    %c0_38 = arith.constant 0 : index
    %c0_39 = arith.constant 0 : index
    %66 = vector.load %arg7[%c0_38, %c0_39] : memref<16x128xf32, #tpu.memory_space<vmem>>, vector<16x128xf32>
    tpu.vector_store %arg7[%c0_38, %c0_39], %65 {strides = array<i32>} : memref<16x128xf32, #tpu.memory_space<vmem>>, vector<16x128xf32>,
    %67 = arith.subf %54, %58 : vector<16x128xf32>
    %c3_i32 = arith.constant 3 : i32
    %68 = arith.index_cast %c3_i32 : i32 to index
    %c0_40 = arith.constant 0 : index
    %c0_41 = arith.constant 0 : index
    %69 = vector.load %arg6[%68, %c0_40, %c0_41] : memref<8x16x128xbf16, #tpu.memory_space<vmem>>, vector<1x16x128xbf16>
    %70 = vector.shape_cast %69 : vector<1x16x128xbf16> to vector<16x128xbf16>
    %71 = arith.extf %70 : vector<16x128xbf16> to vector<16x128xf32>
    %72 = arith.addf %67, %71 : vector<16x128xf32>
    %cst_42 = arith.constant 1.000000e+00 : f32
    %73 = vector.broadcast %cst_42 : f32 to vector<16x128xf32>
    %74 = arith.cmpf oge, %72, %73 : vector<16x128xf32>
    %75 = arith.extui %74 : vector<16x128xi1> to vector<16x128xi32>
    %76 = arith.sitofp %75 : vector<16x128xi32> to vector<16x128xf32>
    %77 = arith.truncf %76 : vector<16x128xf32> to vector<16x128xbf16>
    %78 = arith.index_cast %c3_i32 : i32 to index
    %c0_43 = arith.constant 0 : index
    %c0_44 = arith.constant 0 : index
    %79 = vector.load %arg6[%78, %c0_43, %c0_44] : memref<8x16x128xbf16, #tpu.memory_space<vmem>>, vector<1x16x128xbf16>
    %80 = vector.shape_cast %79 : vector<1x16x128xbf16> to vector<16x128xbf16>
    %81 = vector.shape_cast %77 : vector<16x128xbf16> to vector<1x16x128xbf16>
    tpu.vector_store %arg6[%78, %c0_43, %c0_44], %81 {strides = array<i32>} : memref<8x16x128xbf16, #tpu.memory_space<vmem>>, vector<1x16x128xbf16>,
    %c0_45 = arith.constant 0 : index
    %c0_46 = arith.constant 0 : index
    %82 = vector.load %arg7[%c0_45, %c0_46] : memref<16x128xf32, #tpu.memory_space<vmem>>, vector<16x128xf32>
    %83 = arith.addf %82, %76 : vector<16x128xf32>
    %c0_47 = arith.constant 0 : index
    %c0_48 = arith.constant 0 : index
    %84 = vector.load %arg7[%c0_47, %c0_48] : memref<16x128xf32, #tpu.memory_space<vmem>>, vector<16x128xf32>
    tpu.vector_store %arg7[%c0_47, %c0_48], %83 {strides = array<i32>} : memref<16x128xf32, #tpu.memory_space<vmem>>, vector<16x128xf32>,
    %85 = arith.subf %72, %76 : vector<16x128xf32>
    %c4_i32 = arith.constant 4 : i32
    %86 = arith.index_cast %c4_i32 : i32 to index
    %c0_49 = arith.constant 0 : index
    %c0_50 = arith.constant 0 : index
    %87 = vector.load %arg6[%86, %c0_49, %c0_50] : memref<8x16x128xbf16, #tpu.memory_space<vmem>>, vector<1x16x128xbf16>
    %88 = vector.shape_cast %87 : vector<1x16x128xbf16> to vector<16x128xbf16>
    %89 = arith.extf %88 : vector<16x128xbf16> to vector<16x128xf32>
    %90 = arith.addf %85, %89 : vector<16x128xf32>
    %cst_51 = arith.constant 1.000000e+00 : f32
    %91 = vector.broadcast %cst_51 : f32 to vector<16x128xf32>
    %92 = arith.cmpf oge, %90, %91 : vector<16x128xf32>
    %93 = arith.extui %92 : vector<16x128xi1> to vector<16x128xi32>
    %94 = arith.sitofp %93 : vector<16x128xi32> to vector<16x128xf32>
    %95 = arith.truncf %94 : vector<16x128xf32> to vector<16x128xbf16>
    %96 = arith.index_cast %c4_i32 : i32 to index
    %c0_52 = arith.constant 0 : index
    %c0_53 = arith.constant 0 : index
    %97 = vector.load %arg6[%96, %c0_52, %c0_53] : memref<8x16x128xbf16, #tpu.memory_space<vmem>>, vector<1x16x128xbf16>
    %98 = vector.shape_cast %97 : vector<1x16x128xbf16> to vector<16x128xbf16>
    %99 = vector.shape_cast %95 : vector<16x128xbf16> to vector<1x16x128xbf16>
    tpu.vector_store %arg6[%96, %c0_52, %c0_53], %99 {strides = array<i32>} : memref<8x16x128xbf16, #tpu.memory_space<vmem>>, vector<1x16x128xbf16>,
    %c0_54 = arith.constant 0 : index
    %c0_55 = arith.constant 0 : index
    %100 = vector.load %arg7[%c0_54, %c0_55] : memref<16x128xf32, #tpu.memory_space<vmem>>, vector<16x128xf32>
    %101 = arith.addf %100, %94 : vector<16x128xf32>
    %c0_56 = arith.constant 0 : index
    %c0_57 = arith.constant 0 : index
    %102 = vector.load %arg7[%c0_56, %c0_57] : memref<16x128xf32, #tpu.memory_space<vmem>>, vector<16x128xf32>
    tpu.vector_store %arg7[%c0_56, %c0_57], %101 {strides = array<i32>} : memref<16x128xf32, #tpu.memory_space<vmem>>, vector<16x128xf32>,
    %103 = arith.subf %90, %94 : vector<16x128xf32>
    %c5_i32 = arith.constant 5 : i32
    %104 = arith.index_cast %c5_i32 : i32 to index
    %c0_58 = arith.constant 0 : index
    %c0_59 = arith.constant 0 : index
    %105 = vector.load %arg6[%104, %c0_58, %c0_59] : memref<8x16x128xbf16, #tpu.memory_space<vmem>>, vector<1x16x128xbf16>
    %106 = vector.shape_cast %105 : vector<1x16x128xbf16> to vector<16x128xbf16>
    %107 = arith.extf %106 : vector<16x128xbf16> to vector<16x128xf32>
    %108 = arith.addf %103, %107 : vector<16x128xf32>
    %cst_60 = arith.constant 1.000000e+00 : f32
    %109 = vector.broadcast %cst_60 : f32 to vector<16x128xf32>
    %110 = arith.cmpf oge, %108, %109 : vector<16x128xf32>
    %111 = arith.extui %110 : vector<16x128xi1> to vector<16x128xi32>
    %112 = arith.sitofp %111 : vector<16x128xi32> to vector<16x128xf32>
    %113 = arith.truncf %112 : vector<16x128xf32> to vector<16x128xbf16>
    %114 = arith.index_cast %c5_i32 : i32 to index
    %c0_61 = arith.constant 0 : index
    %c0_62 = arith.constant 0 : index
    %115 = vector.load %arg6[%114, %c0_61, %c0_62] : memref<8x16x128xbf16, #tpu.memory_space<vmem>>, vector<1x16x128xbf16>
    %116 = vector.shape_cast %115 : vector<1x16x128xbf16> to vector<16x128xbf16>
    %117 = vector.shape_cast %113 : vector<16x128xbf16> to vector<1x16x128xbf16>
    tpu.vector_store %arg6[%114, %c0_61, %c0_62], %117 {strides = array<i32>} : memref<8x16x128xbf16, #tpu.memory_space<vmem>>, vector<1x16x128xbf16>,
    %c0_63 = arith.constant 0 : index
    %c0_64 = arith.constant 0 : index
    %118 = vector.load %arg7[%c0_63, %c0_64] : memref<16x128xf32, #tpu.memory_space<vmem>>, vector<16x128xf32>
    %119 = arith.addf %118, %112 : vector<16x128xf32>
    %c0_65 = arith.constant 0 : index
    %c0_66 = arith.constant 0 : index
    %120 = vector.load %arg7[%c0_65, %c0_66] : memref<16x128xf32, #tpu.memory_space<vmem>>, vector<16x128xf32>
    tpu.vector_store %arg7[%c0_65, %c0_66], %119 {strides = array<i32>} : memref<16x128xf32, #tpu.memory_space<vmem>>, vector<16x128xf32>,
    %121 = arith.subf %108, %112 : vector<16x128xf32>
    %c6_i32 = arith.constant 6 : i32
    %122 = arith.index_cast %c6_i32 : i32 to index
    %c0_67 = arith.constant 0 : index
    %c0_68 = arith.constant 0 : index
    %123 = vector.load %arg6[%122, %c0_67, %c0_68] : memref<8x16x128xbf16, #tpu.memory_space<vmem>>, vector<1x16x128xbf16>
    %124 = vector.shape_cast %123 : vector<1x16x128xbf16> to vector<16x128xbf16>
    %125 = arith.extf %124 : vector<16x128xbf16> to vector<16x128xf32>
    %126 = arith.addf %121, %125 : vector<16x128xf32>
    %cst_69 = arith.constant 1.000000e+00 : f32
    %127 = vector.broadcast %cst_69 : f32 to vector<16x128xf32>
    %128 = arith.cmpf oge, %126, %127 : vector<16x128xf32>
    %129 = arith.extui %128 : vector<16x128xi1> to vector<16x128xi32>
    %130 = arith.sitofp %129 : vector<16x128xi32> to vector<16x128xf32>
    %131 = arith.truncf %130 : vector<16x128xf32> to vector<16x128xbf16>
    %132 = arith.index_cast %c6_i32 : i32 to index
    %c0_70 = arith.constant 0 : index
    %c0_71 = arith.constant 0 : index
    %133 = vector.load %arg6[%132, %c0_70, %c0_71] : memref<8x16x128xbf16, #tpu.memory_space<vmem>>, vector<1x16x128xbf16>
    %134 = vector.shape_cast %133 : vector<1x16x128xbf16> to vector<16x128xbf16>
    %135 = vector.shape_cast %131 : vector<16x128xbf16> to vector<1x16x128xbf16>
    tpu.vector_store %arg6[%132, %c0_70, %c0_71], %135 {strides = array<i32>} : memref<8x16x128xbf16, #tpu.memory_space<vmem>>, vector<1x16x128xbf16>,
    %c0_72 = arith.constant 0 : index
    %c0_73 = arith.constant 0 : index
    %136 = vector.load %arg7[%c0_72, %c0_73] : memref<16x128xf32, #tpu.memory_space<vmem>>, vector<16x128xf32>
    %137 = arith.addf %136, %130 : vector<16x128xf32>
    %c0_74 = arith.constant 0 : index
    %c0_75 = arith.constant 0 : index
    %138 = vector.load %arg7[%c0_74, %c0_75] : memref<16x128xf32, #tpu.memory_space<vmem>>, vector<16x128xf32>
    tpu.vector_store %arg7[%c0_74, %c0_75], %137 {strides = array<i32>} : memref<16x128xf32, #tpu.memory_space<vmem>>, vector<16x128xf32>,
    %139 = arith.subf %126, %130 : vector<16x128xf32>
    %c7_i32 = arith.constant 7 : i32
    %140 = arith.index_cast %c7_i32 : i32 to index
    %c0_76 = arith.constant 0 : index
    %c0_77 = arith.constant 0 : index
    %141 = vector.load %arg6[%140, %c0_76, %c0_77] : memref<8x16x128xbf16, #tpu.memory_space<vmem>>, vector<1x16x128xbf16>
    %142 = vector.shape_cast %141 : vector<1x16x128xbf16> to vector<16x128xbf16>
    %143 = arith.extf %142 : vector<16x128xbf16> to vector<16x128xf32>
    %144 = arith.addf %139, %143 : vector<16x128xf32>
    %cst_78 = arith.constant 1.000000e+00 : f32
    %145 = vector.broadcast %cst_78 : f32 to vector<16x128xf32>
    %146 = arith.cmpf oge, %144, %145 : vector<16x128xf32>
    %147 = arith.extui %146 : vector<16x128xi1> to vector<16x128xi32>
    %148 = arith.sitofp %147 : vector<16x128xi32> to vector<16x128xf32>
    %149 = arith.truncf %148 : vector<16x128xf32> to vector<16x128xbf16>
    %150 = arith.index_cast %c7_i32 : i32 to index
    %c0_79 = arith.constant 0 : index
    %c0_80 = arith.constant 0 : index
    %151 = vector.load %arg6[%150, %c0_79, %c0_80] : memref<8x16x128xbf16, #tpu.memory_space<vmem>>, vector<1x16x128xbf16>
    %152 = vector.shape_cast %151 : vector<1x16x128xbf16> to vector<16x128xbf16>
    %153 = vector.shape_cast %149 : vector<16x128xbf16> to vector<1x16x128xbf16>
    tpu.vector_store %arg6[%150, %c0_79, %c0_80], %153 {strides = array<i32>} : memref<8x16x128xbf16, #tpu.memory_space<vmem>>, vector<1x16x128xbf16>,
    %c0_81 = arith.constant 0 : index
    %c0_82 = arith.constant 0 : index
    %154 = vector.load %arg7[%c0_81, %c0_82] : memref<16x128xf32, #tpu.memory_space<vmem>>, vector<16x128xf32>
    %155 = arith.addf %154, %148 : vector<16x128xf32>
    %c0_83 = arith.constant 0 : index
    %c0_84 = arith.constant 0 : index
    %156 = vector.load %arg7[%c0_83, %c0_84] : memref<16x128xf32, #tpu.memory_space<vmem>>, vector<16x128xf32>
    tpu.vector_store %arg7[%c0_83, %c0_84], %155 {strides = array<i32>} : memref<16x128xf32, #tpu.memory_space<vmem>>, vector<16x128xf32>,
    %157 = arith.subf %144, %148 : vector<16x128xf32>
    %c8_i32 = arith.constant 8 : i32
    %c0_85 = arith.constant 0 : index
    %c0_86 = arith.constant 0 : index
    %158 = vector.load %arg8[%c0_85, %c0_86] : memref<16x128xf32, #tpu.memory_space<vmem>>, vector<16x128xf32>
    tpu.vector_store %arg8[%c0_85, %c0_86], %157 {strides = array<i32>} : memref<16x128xf32, #tpu.memory_space<vmem>>, vector<16x128xf32>,
    return
  }
  func.func @transform_0(%arg0: i32, %arg1: i32, %arg2: i32) -> (i32, i32, i32) {
    %c0_i32 = arith.constant 0 : i32
    %c0_i32_0 = arith.constant 0 : i32
    return %arg2, %arg0, %c0_i32 : i32, i32, i32
  }
  func.func @transform_1(%arg0: i32, %arg1: i32, %arg2: i32) -> (i32, i32) {
    %c0_i32 = arith.constant 0 : i32
    %c0_i32_0 = arith.constant 0 : i32
    return %c0_i32, %arg1 : i32, i32
  }
  func.func @transform_2(%arg0: i32, %arg1: i32, %arg2: i32) -> (i32, i32) {
    %c0_i32 = arith.constant 0 : i32
    %c0_i32_0 = arith.constant 0 : i32
    return %c0_i32, %arg1 : i32, i32
  }
  func.func @transform_3(%arg0: i32, %arg1: i32, %arg2: i32) -> (i32, i32, i32) {
    %c0_i32 = arith.constant 0 : i32
    return %arg2, %arg0, %arg1 : i32, i32, i32
  }
  func.func @transform_4(%arg0: i32, %arg1: i32, %arg2: i32) -> (i32, i32) {
    %c0_i32 = arith.constant 0 : i32
    return %arg0, %arg1 : i32, i32
  }
}

</mosaic_0001>

<llo_original>
// kernel: tpu_custom_call.1
$region0: #{tpu_custom_call.1}
  #allocation0 [shape = 'u32[]', space=smem, size = 0x4, offset = 0x4, fixed_abs, tag = 'smem constant byte address 0x4 - core index']
  #allocation1 [shape = 'u32[144,128]{1,0:T(1,128)}', space=vmem, size = 0x12000, scoped, tag = 'internal scratch']
  #allocation2 [shape = 'f32[16,128]{1,0:T(8,128)}', space=vmem, size = 0x2000, scoped, tag = 'scratch operand']
  %s0 = inlined_call_operand.hbm [shape: bf16[8,16,128], index: 0, kind: input, shape index: {}]
  %s1 = inlined_call_operand.hbm [shape: bf16[128,128], index: 1, kind: input, shape index: {}]
  %s2 = inlined_call_operand.vmem [shape: f32[1,128], index: 2, kind: input, shape index: {}]
  %s3 = inlined_call_operand.hbm [shape: bf16[8,16,128], index: 3, kind: output, shape index: {0}]
  %s4 = inlined_call_operand.hbm [shape: f32[16,128], index: 4, kind: output, shape index: {1}]
  %5 = xla_tuple %s3, %s4
  %s6 = sld [smem:[#allocation0]]
  $region42: #{tpu_custom_call.1} parent=0
    _
  %s8 = ssub.s32 1, %s6
  %s9 = scalar_select 0, %s8, %s6
  $region1: #{tpu_custom_call.1} parent=0
    #allocation3 [shape = 'u8[32768]{0}', space=vmem, size = 0x8000, scoped, tag = 'input window, operand 0, single buffered']
    #allocation4 [shape = 's32[1]{0}', space=sflag, size = 0x4, scoped, tag = 'scoped memory for tpu_custom_call.1']
    #allocation5 [shape = 's32[1]{0}', space=sflag, size = 0x4, scoped, tag = 'scoped memory for tpu_custom_call.1']
    #allocation6 [shape = 'u8[32768]{0}', space=vmem, size = 0x8000, scoped, tag = 'input window, operand 1, single buffered']
    #allocation7 [shape = 's32[1]{0}', space=sflag, size = 0x4, scoped, tag = 'scoped memory for tpu_custom_call.1']
    #allocation8 [shape = 'u8[32768]{0}', space=vmem, size = 0x8000, scoped, tag = 'output window, operand 0, single buffered']
    #allocation9 [shape = 'u8[8192]{0}', space=vmem, size = 0x2000, scoped, tag = 'output window, operand 1, single buffered']
    #allocation10 [shape = 's32[1]{0}', space=sflag, size = 0x4, scoped, tag = 'scoped memory for tpu_custom_call.1']
    %10 = vsyncpa [#allocation4], 0
    %11 = vsyncpa [#allocation7], 0
    %12 = vsyncpa [#allocation5], 0
    %13 = vsyncpa [#allocation10], 0
    // Predicated region
    $region2: #{tpu_custom_call.1} parent=1 // pred_check
      _
    $region3: #{tpu_custom_call.1} parent=1 // pred_check_branch
      %15 = sbr.rel (0) target = $region5
    $region4: #{tpu_custom_call.1} parent=1 // pred_region
      %s17 = ssub.s32 1024, 1024
      %18 = vsyncadd [#allocation4], %s17
      %s19 = sshll.u32 [#allocation3], 4
      %s20 = int_to_ptr.vmem [resolvable:$true] %s19
      %25 = dma.hbm_to_vmem [thread:$0]  %s0, 1024, %s20, [#allocation4], 64, 64, 4
    $region5: #{tpu_custom_call.1} parent=1 // pred_fallthru
      _
    // Predicated region
    $region6: #{tpu_custom_call.1} parent=1 // pred_check
      _
    $region7: #{tpu_custom_call.1} parent=1 // pred_check_branch
      %27 = sbr.rel (0) target = $region9
    $region8: #{tpu_custom_call.1} parent=1 // pred_region
      %s29 = ssub.s32 1024, 1024
      %30 = vsyncadd [#allocation7], %s29
      %s31 = sshll.u32 [#allocation6], 4
      %s32 = int_to_ptr.vmem [resolvable:$true] %s31
      %37 = dma.hbm_to_vmem [thread:$0]  %s1, 1024, %s32, [#allocation7], 64, 64, 4
    $region9: #{tpu_custom_call.1} parent=1 // pred_fallthru
      _
    // Predicated region
    $region10: #{tpu_custom_call.1} parent=1 // pred_check
      _
    $region11: #{tpu_custom_call.1} parent=1 // pred_check_branch
      %39 = sbr.rel (0) target = $region13
    $region12: #{tpu_custom_call.1} parent=1 // pred_region
      _
    $region13: #{tpu_custom_call.1} parent=1 // pred_fallthru
      _
    // Predicated region
    $region14: #{tpu_custom_call.1} parent=1 // pred_check
      _
    $region15: #{tpu_custom_call.1} parent=1 // pred_check_branch
      %41 = sbr.rel (0) target = $region17
    $region16: #{tpu_custom_call.1} parent=1 // pred_region
      %42 = dma.done [#allocation4], 1024
    $region17: #{tpu_custom_call.1} parent=1 // pred_fallthru
      _
    // Predicated region
    $region18: #{tpu_custom_call.1} parent=1 // pred_check
      _
    $region19: #{tpu_custom_call.1} parent=1 // pred_check_branch
      %44 = sbr.rel (0) target = $region21
    $region20: #{tpu_custom_call.1} parent=1 // pred_region
      %45 = dma.done [#allocation7], 1024
    $region21: #{tpu_custom_call.1} parent=1 // pred_fallthru
      _
    %p47 = scmp.eq.s32.totalorder 0, 0
    // Predicated region
    $region22: #{tpu_custom_call.1} parent=1 // pred_check
      %p48 = pneg %p47
    $region23: #{tpu_custom_call.1} parent=1 // pred_check_branch
      %50 = sbr.rel (%p48) target = $region25
    $region24: #{tpu_custom_call.1} parent=1 // pred_region
      %51 = vst [vmem:[#allocation2] sm:$0xff] 0.0
      %52 = vst [vmem:[#allocation2 + $0x8] sm:$0xff] 0.0
      %53 = vst [vmem:[#allocation9] sm:$0xff] 0.0
      %54 = vst [vmem:[#allocation9 + $0x8] sm:$0xff] 0.0
    $region25: #{tpu_custom_call.1} parent=1 // pred_fallthru
      _
    %v55 = vld [vmem:[#allocation3] sm:$0xf]
    %v56 = vld [vmem:[#allocation3 + $0x4] sm:$0xf]
    %v57 = vld [vmem:[#allocation3 + $0x8] sm:$0xf]
    %v58 = vld [vmem:[#allocation3 + $0xc] sm:$0xf]
    %v59 = vld [vmem:[#allocation3 + $0x10] sm:$0xf]
    %v60 = vld [vmem:[#allocation3 + $0x14] sm:$0xf]
    %v61 = vld [vmem:[#allocation3 + $0x18] sm:$0xf]
    %v62 = vld [vmem:[#allocation3 + $0x1c] sm:$0xf]
    %v63 = vld [vmem:[#allocation3 + $0x20] sm:$0xf]
    %v64 = vld [vmem:[#allocation3 + $0x24] sm:$0xf]
    %v65 = vld [vmem:[#allocation3 + $0x28] sm:$0xf]
    %v66 = vld [vmem:[#allocation3 + $0x2c] sm:$0xf]
    %v67 = vld [vmem:[#allocation3 + $0x30] sm:$0xf]
    %v68 = vld [vmem:[#allocation3 + $0x34] sm:$0xf]
    %v69 = vld [vmem:[#allocation3 + $0x38] sm:$0xf]
    %v70 = vld [vmem:[#allocation3 + $0x3c] sm:$0xf]
    %v71 = vld [vmem:[#allocation6] sm:$0xf]
    %v72 = vld [vmem:[#allocation6 + $0x4] sm:$0xf]
    %v73 = vld [vmem:[#allocation6 + $0x8] sm:$0xf]
    %v74 = vld [vmem:[#allocation6 + $0xc] sm:$0xf]
    %v75 = vld [vmem:[#allocation6 + $0x10] sm:$0xf]
    %v76 = vld [vmem:[#allocation6 + $0x14] sm:$0xf]
    %v77 = vld [vmem:[#allocation6 + $0x18] sm:$0xf]
    %v78 = vld [vmem:[#allocation6 + $0x1c] sm:$0xf]
    %v79 = vld [vmem:[#allocation6 + $0x20] sm:$0xf]
    %v80 = vld [vmem:[#allocation6 + $0x24] sm:$0xf]
    %v81 = vld [vmem:[#allocation6 + $0x28] sm:$0xf]
    %v82 = vld [vmem:[#allocation6 + $0x2c] sm:$0xf]
    %v83 = vld [vmem:[#allocation6 + $0x30] sm:$0xf]
    %v84 = vld [vmem:[#allocation6 + $0x34] sm:$0xf]
    %v85 = vld [vmem:[#allocation6 + $0x38] sm:$0xf]
    %v86 = vld [vmem:[#allocation6 + $0x3c] sm:$0xf]
    %v87 = vld [vmem:[%s2] sm:$0x1]
    %v89 = vlaneseq
    %v90 = vshrl.u32 %v89, 7
    %v91 = vsub.s32 0, %v90
    %v92 = vrot.slane %v87, %v91
    %v110 = vunpack.c.l.b16 %v55
    %v111 = vunpack.c.l.b16 %v56
    %v112 = vunpack.c.l.b16 %v57
    %v113 = vunpack.c.l.b16 %v58
    %v114 = vunpack.c.l.b16 %v59
    %v115 = vunpack.c.l.b16 %v60
    %v116 = vunpack.c.l.b16 %v61
    %v117 = vunpack.c.l.b16 %v62
    %v118 = vunpack.c.l.b16 %v63
    %v119 = vunpack.c.l.b16 %v64
    %v120 = vunpack.c.l.b16 %v65
    %v121 = vunpack.c.l.b16 %v66
    %v122 = vunpack.c.l.b16 %v67
    %v123 = vunpack.c.l.b16 %v68
    %v124 = vunpack.c.l.b16 %v69
    %v125 = vunpack.c.l.b16 %v70
    %v126 = vpack.c.b16 %v111, %v110
    %v127 = vpack.c.b16 %v113, %v112
    %v128 = vpack.c.b16 %v115, %v114
    %v129 = vpack.c.b16 %v117, %v116
    %v130 = vpack.c.b16 %v119, %v118
    %v131 = vpack.c.b16 %v121, %v120
    %v132 = vpack.c.b16 %v123, %v122
    %v133 = vpack.c.b16 %v125, %v124
    %v158 = vunpack.c.l.b16 %v71
    %v159 = vunpack.c.l.b16 %v72
    %v160 = vunpack.c.l.b16 %v73
    %v161 = vunpack.c.l.b16 %v74
    %v162 = vunpack.c.l.b16 %v75
    %v163 = vunpack.c.l.b16 %v76
    %v164 = vunpack.c.l.b16 %v77
    %v165 = vunpack.c.l.b16 %v78
    %v166 = vunpack.c.l.b16 %v79
    %v167 = vunpack.c.l.b16 %v80
    %v168 = vunpack.c.l.b16 %v81
    %v169 = vunpack.c.l.b16 %v82
    %v170 = vunpack.c.l.b16 %v83
    %v171 = vunpack.c.l.b16 %v84
    %v172 = vunpack.c.l.b16 %v85
    %v173 = vunpack.c.l.b16 %v86
    %v174 = vpack.c.b16 %v159, %v158
    %v175 = vpack.c.b16 %v161, %v160
    %v176 = vpack.c.b16 %v163, %v162
    %v177 = vpack.c.b16 %v165, %v164
    %v178 = vpack.c.b16 %v167, %v166
    %v179 = vpack.c.b16 %v169, %v168
    %v180 = vpack.c.b16 %v171, %v170
    %v181 = vpack.c.b16 %v173, %v172
    %190 = vmatprep.subr.bf16.mxu0 0
    %191 = vmatpush1.bf16.msra.mxu0 %v181
    %192 = vmatprep.subr.bf16.mxu0 0
    %193 = vmatpush1.bf16.msra.mxu0 %v180
    %194 = vmatprep.subr.bf16.mxu0 0
    %195 = vmatpush1.bf16.msra.mxu0 %v179
    %196 = vmatprep.subr.bf16.mxu0 0
    %197 = vmatpush1.bf16.msra.mxu0 %v178
    %198 = vmatprep.subr.bf16.mxu0 0
    %199 = vmatpush1.bf16.msra.mxu0 %v177
    %200 = vmatprep.subr.bf16.mxu0 0
    %201 = vmatpush1.bf16.msra.mxu0 %v176
    %202 = vmatprep.subr.bf16.mxu0 0
    %203 = vmatpush1.bf16.msra.mxu0 %v175
    %204 = vmatprep.subr.bf16.mxu0 0
    %205 = vmatpush1.bf16.msra.mxu0 %v174
    %206 = vmatprep.subr.bf16.mxu0 0
    %207 = vmatpush2.bf16.msra.mxu0 0
    %208 = vmatprep.subr.bf16.mxu0 0
    %209 = vmatpush2.bf16.msra.mxu0 0
    %210 = vmatprep.subr.bf16.mxu0 0
    %211 = vmatpush2.bf16.msra.mxu0 0
    %212 = vmatprep.subr.bf16.mxu0 0
    %213 = vmatpush2.bf16.msra.mxu0 0
    %214 = vmatprep.subr.bf16.mxu0 0
    %215 = vmatpush2.bf16.msra.mxu0 0
    %216 = vmatprep.subr.bf16.mxu0 0
    %217 = vmatpush2.bf16.msra.mxu0 0
    %218 = vmatprep.subr.bf16.mxu0 0
    %219 = vmatpush2.bf16.msra.mxu0 0
    %220 = vmatprep.subr.bf16.mxu0 0
    %221 = vmatpush2.bf16.msra.mxu0 0
    %222 = vmatprep.mubr.bf16.mxu0 0
    %223 = vmatmul.mubr.bf16.gmra.mxu0 %v126
    %v224 = vpop.f32.mrf.mxu0
    %v225 = vadd.f32 %v92, %v224
    %v226 = vpop.f32.mrf.mxu0
    %v227 = vpop.f32.mrf.mxu0
    %v228 = vadd.f32 %v92, %v227
    %v229 = vpop.f32.mrf.mxu0
    %230 = vmatprep.mubr.bf16.mxu0 0
    %231 = vmatmul.mubr.bf16.gmra.mxu0 %v127
    %v232 = vpop.f32.mrf.mxu0
    %v233 = vadd.f32 %v92, %v232
    %v234 = vpop.f32.mrf.mxu0
    %v235 = vpop.f32.mrf.mxu0
    %v236 = vadd.f32 %v92, %v235
    %v237 = vpop.f32.mrf.mxu0
    %238 = vmatprep.mubr.bf16.mxu0 0
    %239 = vmatmul.mubr.bf16.gmra.mxu0 %v128
    %v240 = vpop.f32.mrf.mxu0
    %v241 = vadd.f32 %v92, %v240
    %v242 = vpop.f32.mrf.mxu0
    %v243 = vpop.f32.mrf.mxu0
    %v244 = vadd.f32 %v92, %v243
    %v245 = vpop.f32.mrf.mxu0
    %246 = vmatprep.mubr.bf16.mxu0 0
    %247 = vmatmul.mubr.bf16.gmra.mxu0 %v129
    %v248 = vpop.f32.mrf.mxu0
    %v249 = vadd.f32 %v92, %v248
    %v250 = vpop.f32.mrf.mxu0
    %v251 = vpop.f32.mrf.mxu0
    %v252 = vadd.f32 %v92, %v251
    %v253 = vpop.f32.mrf.mxu0
    %254 = vmatprep.mubr.bf16.mxu0 0
    %255 = vmatmul.mubr.bf16.gmra.mxu0 %v130
    %v256 = vpop.f32.mrf.mxu0
    %v257 = vadd.f32 %v92, %v256
    %v258 = vpop.f32.mrf.mxu0
    %v259 = vpop.f32.mrf.mxu0
    %v260 = vadd.f32 %v92, %v259
    %v261 = vpop.f32.mrf.mxu0
    %262 = vmatprep.mubr.bf16.mxu0 0
    %263 = vmatmul.mubr.bf16.gmra.mxu0 %v131
    %v264 = vpop.f32.mrf.mxu0
    %v265 = vadd.f32 %v92, %v264
    %v266 = vpop.f32.mrf.mxu0
    %v267 = vpop.f32.mrf.mxu0
    %v268 = vadd.f32 %v92, %v267
    %v269 = vpop.f32.mrf.mxu0
    %270 = vmatprep.mubr.bf16.mxu0 0
    %271 = vmatmul.mubr.bf16.gmra.mxu0 %v132
    %v272 = vpop.f32.mrf.mxu0
    %v273 = vadd.f32 %v92, %v272
    %v274 = vpop.f32.mrf.mxu0
    %v275 = vpop.f32.mrf.mxu0
    %v276 = vadd.f32 %v92, %v275
    %v277 = vpop.f32.mrf.mxu0
    %278 = vmatprep.mubr.bf16.mxu0 0
    %279 = vmatmul.mubr.bf16.gmra.mxu0 %v133
    %v280 = vpop.f32.mrf.mxu0
    %v281 = vadd.f32 %v92, %v280
    %v282 = vpop.f32.mrf.mxu0
    %v283 = vpop.f32.mrf.mxu0
    %v284 = vadd.f32 %v92, %v283
    %v285 = vpop.f32.mrf.mxu0
    %286 = vdwg.mxu0
    %v287 = vpack.c.bf16 %v228, %v225
    %v288 = vpack.c.bf16 %v236, %v233
    %v289 = vpack.c.bf16 %v244, %v241
    %v290 = vpack.c.bf16 %v252, %v249
    %v291 = vpack.c.bf16 %v260, %v257
    %v292 = vpack.c.bf16 %v268, %v265
    %v293 = vpack.c.bf16 %v276, %v273
    %v294 = vpack.c.bf16 %v284, %v281
    %v303 = vunpack.c.l.b16 %v287
    %v304 = vunpack.c.h.b16 %v287
    %v305 = vunpack.c.l.b16 %v288
    %v306 = vunpack.c.h.b16 %v288
    %v307 = vunpack.c.l.b16 %v289
    %v308 = vunpack.c.h.b16 %v289
    %v309 = vunpack.c.l.b16 %v290
    %v310 = vunpack.c.h.b16 %v290
    %v311 = vunpack.c.l.b16 %v291
    %v312 = vunpack.c.h.b16 %v291
    %v313 = vunpack.c.l.b16 %v292
    %v314 = vunpack.c.h.b16 %v292
    %v315 = vunpack.c.l.b16 %v293
    %v316 = vunpack.c.h.b16 %v293
    %v317 = vunpack.c.l.b16 %v294
    %v318 = vunpack.c.h.b16 %v294
    %v319 = vpack.c.b16 %v303, %v303
    %v320 = vpack.c.b16 %v304, %v304
    %v321 = vpack.c.b16 %v305, %v305
    %v322 = vpack.c.b16 %v306, %v306
    %v323 = vpack.c.b16 %v307, %v307
    %v324 = vpack.c.b16 %v308, %v308
    %v325 = vpack.c.b16 %v309, %v309
    %v326 = vpack.c.b16 %v310, %v310
    %v327 = vpack.c.b16 %v311, %v311
    %v328 = vpack.c.b16 %v312, %v312
    %v329 = vpack.c.b16 %v313, %v313
    %v330 = vpack.c.b16 %v314, %v314
    %v331 = vpack.c.b16 %v315, %v315
    %v332 = vpack.c.b16 %v316, %v316
    %v333 = vpack.c.b16 %v317, %v317
    %v334 = vpack.c.b16 %v318, %v318
    %351 = vst [vmem:[#allocation8] sm:$0xf] %v319
    %352 = vst [vmem:[#allocation8 + $0x4] sm:$0xf] %v320
    %353 = vst [vmem:[#allocation8 + $0x8] sm:$0xf] %v321
    %354 = vst [vmem:[#allocation8 + $0xc] sm:$0xf] %v322
    %355 = vst [vmem:[#allocation8 + $0x10] sm:$0xf] %v323
    %356 = vst [vmem:[#allocation8 + $0x14] sm:$0xf] %v324
    %357 = vst [vmem:[#allocation8 + $0x18] sm:$0xf] %v325
    %358 = vst [vmem:[#allocation8 + $0x1c] sm:$0xf] %v326
    %359 = vst [vmem:[#allocation8 + $0x20] sm:$0xf] %v327
    %360 = vst [vmem:[#allocation8 + $0x24] sm:$0xf] %v328
    %361 = vst [vmem:[#allocation8 + $0x28] sm:$0xf] %v329
    %362 = vst [vmem:[#allocation8 + $0x2c] sm:$0xf] %v330
    %363 = vst [vmem:[#allocation8 + $0x30] sm:$0xf] %v331
    %364 = vst [vmem:[#allocation8 + $0x34] sm:$0xf] %v332
    %365 = vst [vmem:[#allocation8 + $0x38] sm:$0xf] %v333
    %366 = vst [vmem:[#allocation8 + $0x3c] sm:$0xf] %v334
    %v367 = vld [vmem:[#allocation2] sm:$0xff]
    %v368 = vld [vmem:[#allocation2 + $0x8] sm:$0xff]
    %v369 = vld [vmem:[#allocation8] sm:$0xf]
    %v370 = vld [vmem:[#allocation8 + $0x4] sm:$0xf]
    %v371 = vunpack.c.l.bf16 %v369
    %v372 = vunpack.c.l.bf16 %v370
    %v373 = vadd.f32 %v367, %v371
    %v374 = vadd.f32 %v368, %v372
    %vm375 = vcmp.ge.f32.partialorder %v373, 1.0
    %vm376 = vcmp.ge.f32.partialorder %v374, 1.0
    %v377 = vsel %vm375, 1, 0
    %v378 = vsel %vm376, 1, 0
    %v379 = vcvt.s32.f32 %v377
    %v380 = vcvt.s32.f32 %v378
    %v381 = vpack.c.bf16 %v380, %v379
    %v383 = vunpack.c.l.b16 %v381
    %v384 = vunpack.c.h.b16 %v381
    %v385 = vpack.c.b16 %v383, %v383
    %v386 = vpack.c.b16 %v384, %v384
    %389 = vst [vmem:[#allocation8] sm:$0xf] %v385
    %390 = vst [vmem:[#allocation8 + $0x4] sm:$0xf] %v386
    %v391 = vld [vmem:[#allocation9] sm:$0xff]
    %v392 = vld [vmem:[#allocation9 + $0x8] sm:$0xff]
    %v393 = vadd.f32 %v391, %v379
    %v394 = vadd.f32 %v392, %v380
    %395 = vst [vmem:[#allocation9] sm:$0xff] %v393
    %396 = vst [vmem:[#allocation9 + $0x8] sm:$0xff] %v394
    %v397 = vsub.f32 %v373, %v379
    %v398 = vsub.f32 %v374, %v380
    %s399 = scalar_lea.vmem [#allocation8], 8
    %v400 = vld [vmem:[%s399] sm:$0xf]
    %v401 = vld [vmem:[%s399 + $0x4] sm:$0xf]
    %v402 = vunpack.c.l.bf16 %v400
    %v403 = vunpack.c.l.bf16 %v401
    %v404 = vadd.f32 %v397, %v402
    %v405 = vadd.f32 %v398, %v403
    %vm406 = vcmp.ge.f32.partialorder %v404, 1.0
    %vm407 = vcmp.ge.f32.partialorder %v405, 1.0
    %v408 = vsel %vm406, 1, 0
    %v409 = vsel %vm407, 1, 0
    %v410 = vcvt.s32.f32 %v408
    %v411 = vcvt.s32.f32 %v409
    %v412 = vpack.c.bf16 %v411, %v410
    %v414 = vunpack.c.l.b16 %v412
    %v415 = vunpack.c.h.b16 %v412
    %v416 = vpack.c.b16 %v414, %v414
    %v417 = vpack.c.b16 %v415, %v415
    %420 = vst [vmem:[%s399] sm:$0xf] %v416
    %421 = vst [vmem:[%s399 + $0x4] sm:$0xf] %v417
    %v422 = vld [vmem:[#allocation9] sm:$0xff]
    %v423 = vld [vmem:[#allocation9 + $0x8] sm:$0xff]
    %v424 = vadd.f32 %v422, %v410
    %v425 = vadd.f32 %v423, %v411
    %426 = vst [vmem:[#allocation9] sm:$0xff] %v424
    %427 = vst [vmem:[#allocation9 + $0x8] sm:$0xff] %v425
    %v428 = vsub.f32 %v404, %v410
    %v429 = vsub.f32 %v405, %v411
    %s430 = scalar_lea.vmem [#allocation8], 16
    %v431 = vld [vmem:[%s430] sm:$0xf]
    %v432 = vld [vmem:[%s430 + $0x4] sm:$0xf]
    %v433 = vunpack.c.l.bf16 %v431
    %v434 = vunpack.c.l.bf16 %v432
    %v435 = vadd.f32 %v428, %v433
    %v436 = vadd.f32 %v429, %v434
    %vm437 = vcmp.ge.f32.partialorder %v435, 1.0
    %vm438 = vcmp.ge.f32.partialorder %v436, 1.0
    %v439 = vsel %vm437, 1, 0
    %v440 = vsel %vm438, 1, 0
    %v441 = vcvt.s32.f32 %v439
    %v442 = vcvt.s32.f32 %v440
    %v443 = vpack.c.bf16 %v442, %v441
    %v445 = vunpack.c.l.b16 %v443
    %v446 = vunpack.c.h.b16 %v443
    %v447 = vpack.c.b16 %v445, %v445
    %v448 = vpack.c.b16 %v446, %v446
    %451 = vst [vmem:[%s430] sm:$0xf] %v447
    %452 = vst [vmem:[%s430 + $0x4] sm:$0xf] %v448
    %v453 = vld [vmem:[#allocation9] sm:$0xff]
    %v454 = vld [vmem:[#allocation9 + $0x8] sm:$0xff]
    %v455 = vadd.f32 %v453, %v441
    %v456 = vadd.f32 %v454, %v442
    %457 = vst [vmem:[#allocation9] sm:$0xff] %v455
    %458 = vst [vmem:[#allocation9 + $0x8] sm:$0xff] %v456
    %v459 = vsub.f32 %v435, %v441
    %v460 = vsub.f32 %v436, %v442
    %s461 = scalar_lea.vmem [#allocation8], 24
    %v462 = vld [vmem:[%s461] sm:$0xf]
    %v463 = vld [vmem:[%s461 + $0x4] sm:$0xf]
    %v464 = vunpack.c.l.bf16 %v462
    %v465 = vunpack.c.l.bf16 %v463
    %v466 = vadd.f32 %v459, %v464
    %v467 = vadd.f32 %v460, %v465
    %vm468 = vcmp.ge.f32.partialorder %v466, 1.0
    %vm469 = vcmp.ge.f32.partialorder %v467, 1.0
    %v470 = vsel %vm468, 1, 0
    %v471 = vsel %vm469, 1, 0
    %v472 = vcvt.s32.f32 %v470
    %v473 = vcvt.s32.f32 %v471
    %v474 = vpack.c.bf16 %v473, %v472
    %v476 = vunpack.c.l.b16 %v474
    %v477 = vunpack.c.h.b16 %v474
    %v478 = vpack.c.b16 %v476, %v476
    %v479 = vpack.c.b16 %v477, %v477
    %482 = vst [vmem:[%s461] sm:$0xf] %v478
    %483 = vst [vmem:[%s461 + $0x4] sm:$0xf] %v479
    %v484 = vld [vmem:[#allocation9] sm:$0xff]
    %v485 = vld [vmem:[#allocation9 + $0x8] sm:$0xff]
    %v486 = vadd.f32 %v484, %v472
    %v487 = vadd.f32 %v485, %v473
    %488 = vst [vmem:[#allocation9] sm:$0xff] %v486
    %489 = vst [vmem:[#allocation9 + $0x8] sm:$0xff] %v487
    %v490 = vsub.f32 %v466, %v472
    %v491 = vsub.f32 %v467, %v473
    %s492 = scalar_lea.vmem [#allocation8], 32
    %v493 = vld [vmem:[%s492] sm:$0xf]
    %v494 = vld [vmem:[%s492 + $0x4] sm:$0xf]
    %v495 = vunpack.c.l.bf16 %v493
    %v496 = vunpack.c.l.bf16 %v494
    %v497 = vadd.f32 %v490, %v495
    %v498 = vadd.f32 %v491, %v496
    %vm499 = vcmp.ge.f32.partialorder %v497, 1.0
    %vm500 = vcmp.ge.f32.partialorder %v498, 1.0
    %v501 = vsel %vm499, 1, 0
    %v502 = vsel %vm500, 1, 0
    %v503 = vcvt.s32.f32 %v501
    %v504 = vcvt.s32.f32 %v502
    %v505 = vpack.c.bf16 %v504, %v503
    %v507 = vunpack.c.l.b16 %v505
    %v508 = vunpack.c.h.b16 %v505
    %v509 = vpack.c.b16 %v507, %v507
    %v510 = vpack.c.b16 %v508, %v508
    %513 = vst [vmem:[%s492] sm:$0xf] %v509
    %514 = vst [vmem:[%s492 + $0x4] sm:$0xf] %v510
    %v515 = vld [vmem:[#allocation9] sm:$0xff]
    %v516 = vld [vmem:[#allocation9 + $0x8] sm:$0xff]
    %v517 = vadd.f32 %v515, %v503
    %v518 = vadd.f32 %v516, %v504
    %519 = vst [vmem:[#allocation9] sm:$0xff] %v517
    %520 = vst [vmem:[#allocation9 + $0x8] sm:$0xff] %v518
    %v521 = vsub.f32 %v497, %v503
    %v522 = vsub.f32 %v498, %v504
    %s523 = scalar_lea.vmem [#allocation8], 40
    %v524 = vld [vmem:[%s523] sm:$0xf]
    %v525 = vld [vmem:[%s523 + $0x4] sm:$0xf]
    %v526 = vunpack.c.l.bf16 %v524
    %v527 = vunpack.c.l.bf16 %v525
    %v528 = vadd.f32 %v521, %v526
    %v529 = vadd.f32 %v522, %v527
    %vm530 = vcmp.ge.f32.partialorder %v528, 1.0
    %vm531 = vcmp.ge.f32.partialorder %v529, 1.0
    %v532 = vsel %vm530, 1, 0
    %v533 = vsel %vm531, 1, 0
    %v534 = vcvt.s32.f32 %v532
    %v535 = vcvt.s32.f32 %v533
    %v536 = vpack.c.bf16 %v535, %v534
    %v538 = vunpack.c.l.b16 %v536
    %v539 = vunpack.c.h.b16 %v536
    %v540 = vpack.c.b16 %v538, %v538
    %v541 = vpack.c.b16 %v539, %v539
    %544 = vst [vmem:[%s523] sm:$0xf] %v540
    %545 = vst [vmem:[%s523 + $0x4] sm:$0xf] %v541
    %v546 = vld [vmem:[#allocation9] sm:$0xff]
    %v547 = vld [vmem:[#allocation9 + $0x8] sm:$0xff]
    %v548 = vadd.f32 %v546, %v534
    %v549 = vadd.f32 %v547, %v535
    %550 = vst [vmem:[#allocation9] sm:$0xff] %v548
    %551 = vst [vmem:[#allocation9 + $0x8] sm:$0xff] %v549
    %v552 = vsub.f32 %v528, %v534
    %v553 = vsub.f32 %v529, %v535
    %s554 = scalar_lea.vmem [#allocation8], 48
    %v555 = vld [vmem:[%s554] sm:$0xf]
    %v556 = vld [vmem:[%s554 + $0x4] sm:$0xf]
    %v557 = vunpack.c.l.bf16 %v555
    %v558 = vunpack.c.l.bf16 %v556
    %v559 = vadd.f32 %v552, %v557
    %v560 = vadd.f32 %v553, %v558
    %vm561 = vcmp.ge.f32.partialorder %v559, 1.0
    %vm562 = vcmp.ge.f32.partialorder %v560, 1.0
    %v563 = vsel %vm561, 1, 0
    %v564 = vsel %vm562, 1, 0
    %v565 = vcvt.s32.f32 %v563
    %v566 = vcvt.s32.f32 %v564
    %v567 = vpack.c.bf16 %v566, %v565
    %v569 = vunpack.c.l.b16 %v567
    %v570 = vunpack.c.h.b16 %v567
    %v571 = vpack.c.b16 %v569, %v569
    %v572 = vpack.c.b16 %v570, %v570
    %575 = vst [vmem:[%s554] sm:$0xf] %v571
    %576 = vst [vmem:[%s554 + $0x4] sm:$0xf] %v572
    %v577 = vld [vmem:[#allocation9] sm:$0xff]
    %v578 = vld [vmem:[#allocation9 + $0x8] sm:$0xff]
    %v579 = vadd.f32 %v577, %v565
    %v580 = vadd.f32 %v578, %v566
    %581 = vst [vmem:[#allocation9] sm:$0xff] %v579
    %582 = vst [vmem:[#allocation9 + $0x8] sm:$0xff] %v580
    %v583 = vsub.f32 %v559, %v565
    %v584 = vsub.f32 %v560, %v566
    %s585 = scalar_lea.vmem [#allocation8], 56
    %v586 = vld [vmem:[%s585] sm:$0xf]
    %v587 = vld [vmem:[%s585 + $0x4] sm:$0xf]
    %v588 = vunpack.c.l.bf16 %v586
    %v589 = vunpack.c.l.bf16 %v587
    %v590 = vadd.f32 %v583, %v588
    %v591 = vadd.f32 %v584, %v589
    %vm592 = vcmp.ge.f32.partialorder %v590, 1.0
    %vm593 = vcmp.ge.f32.partialorder %v591, 1.0
    %v594 = vsel %vm592, 1, 0
    %v595 = vsel %vm593, 1, 0
    %v596 = vcvt.s32.f32 %v594
    %v597 = vcvt.s32.f32 %v595
    %v598 = vpack.c.bf16 %v597, %v596
    %v600 = vunpack.c.l.b16 %v598
    %v601 = vunpack.c.h.b16 %v598
    %v602 = vpack.c.b16 %v600, %v600
    %v603 = vpack.c.b16 %v601, %v601
    %606 = vst [vmem:[%s585] sm:$0xf] %v602
    %607 = vst [vmem:[%s585 + $0x4] sm:$0xf] %v603
    %v608 = vld [vmem:[#allocation9] sm:$0xff]
    %v609 = vld [vmem:[#allocation9 + $0x8] sm:$0xff]
    %v610 = vadd.f32 %v608, %v596
    %v611 = vadd.f32 %v609, %v597
    %612 = vst [vmem:[#allocation9] sm:$0xff] %v610
    %613 = vst [vmem:[#allocation9 + $0x8] sm:$0xff] %v611
    %v614 = vsub.f32 %v590, %v596
    %v615 = vsub.f32 %v591, %v597
    %616 = vst [vmem:[#allocation2] sm:$0xff] %v614
    %617 = vst [vmem:[#allocation2 + $0x8] sm:$0xff] %v615
    // Predicated region
    $region26: #{tpu_custom_call.1} parent=1 // pred_check
      _
    $region27: #{tpu_custom_call.1} parent=1 // pred_check_branch
      %619 = sbr.rel (0) target = $region29
    $region28: #{tpu_custom_call.1} parent=1 // pred_region
      %s621 = ssub.s32 1024, 1024
      %622 = vsyncadd [#allocation5], %s621
      %s623 = sshll.u32 [#allocation8], 4
      %s624 = int_to_ptr.vmem [resolvable:$true] %s623
      %629 = dma.vmem_to_hbm [thread:$0]  %s624, 1024, %s3, [#allocation5], 64, 64, 4
    $region29: #{tpu_custom_call.1} parent=1 // pred_fallthru
      _
    // Predicated region
    $region30: #{tpu_custom_call.1} parent=1 // pred_check
      _
    $region31: #{tpu_custom_call.1} parent=1 // pred_check_branch
      %631 = sbr.rel (0) target = $region33
    $region32: #{tpu_custom_call.1} parent=1 // pred_region
      %s633 = ssub.s32 256, 256
      %634 = vsyncadd [#allocation10], %s633
      %s635 = sshll.u32 [#allocation9], 4
      %s636 = int_to_ptr.vmem [resolvable:$true] %s635
      %641 = dma.vmem_to_hbm [thread:$0]  %s636, 256, %s4, [#allocation10], 128, 128, 8
    $region33: #{tpu_custom_call.1} parent=1 // pred_fallthru
      _
    // Predicated region
    $region34: #{tpu_custom_call.1} parent=1 // pred_check
      _
    $region35: #{tpu_custom_call.1} parent=1 // pred_check_branch
      %643 = sbr.rel (0) target = $region37
    $region36: #{tpu_custom_call.1} parent=1 // pred_region
      %644 = dma.done [#allocation5], 1024
    $region37: #{tpu_custom_call.1} parent=1 // pred_fallthru
      _
    // Predicated region
    $region38: #{tpu_custom_call.1} parent=1 // pred_check
      _
    $region39: #{tpu_custom_call.1} parent=1 // pred_check_branch
      %646 = sbr.rel (0) target = $region41
    $region40: #{tpu_custom_call.1} parent=1 // pred_region
      %647 = dma.done [#allocation10], 256
    $region41: #{tpu_custom_call.1} parent=1 // pred_fallthru
      _
    %648 = vsyncpa [#allocation4], 1
    %649 = vsyncpa [#allocation7], 1
    %650 = vsyncpa [#allocation5], 1
    %651 = vsyncpa [#allocation10], 1

// kernel: tpu_custom_call.1
$region0: #{tpu_custom_call.1}
  #allocation0 [shape = 'u32[]', space=smem, size = 0x4, offset = 0x4, fixed_abs, tag = 'smem constant byte address 0x4 - core index']
  #allocation1 [shape = 'u32[144,128]{1,0:T(1,128)}', space=vmem, size = 0x12000, scoped, tag = 'internal scratch']
  #allocation2 [shape = 'f32[16,128]{1,0:T(8,128)}', space=vmem, size = 0x2000, scoped, tag = 'scratch operand']
  %s0 = inlined_call_operand.hbm [shape: bf16[8,16,128], index: 0, kind: input, shape index: {}]
  %s1 = inlined_call_operand.hbm [shape: bf16[128,128], index: 1, kind: input, shape index: {}]
  %s2 = inlined_call_operand.vmem [shape: f32[1,128], index: 2, kind: input, shape index: {}]
  %s3 = inlined_call_operand.hbm [shape: bf16[8,16,128], index: 3, kind: output, shape index: {0}]
  %s4 = inlined_call_operand.hbm [shape: f32[16,128], index: 4, kind: output, shape index: {1}]
  %5 = xla_tuple %s3, %s4
  %s6 = sld [smem:[#allocation0]]
  $region42: #{tpu_custom_call.1} parent=0
    _
  %s8 = ssub.s32 1, %s6
  %s9 = scalar_select 0, %s8, %s6
  $region1: #{tpu_custom_call.1} parent=0
    #allocation3 [shape = 'u8[32768]{0}', space=vmem, size = 0x8000, scoped, tag = 'input window, operand 0, single buffered']
    #allocation4 [shape = 's32[1]{0}', space=sflag, size = 0x4, scoped, tag = 'scoped memory for tpu_custom_call.1']
    #allocation5 [shape = 's32[1]{0}', space=sflag, size = 0x4, scoped, tag = 'scoped memory for tpu_custom_call.1']
    #allocation6 [shape = 'u8[32768]{0}', space=vmem, size = 0x8000, scoped, tag = 'input window, operand 1, single buffered']
    #allocation7 [shape = 's32[1]{0}', space=sflag, size = 0x4, scoped, tag = 'scoped memory for tpu_custom_call.1']
    #allocation8 [shape = 'u8[32768]{0}', space=vmem, size = 0x8000, scoped, tag = 'output window, operand 0, single buffered']
    #allocation9 [shape = 'u8[8192]{0}', space=vmem, size = 0x2000, scoped, tag = 'output window, operand 1, single buffered']
    #allocation10 [shape = 's32[1]{0}', space=sflag, size = 0x4, scoped, tag = 'scoped memory for tpu_custom_call.1']
    %10 = vsyncpa [#allocation4], 0
    %11 = vsyncpa [#allocation7], 0
    %12 = vsyncpa [#allocation5], 0
    %13 = vsyncpa [#allocation10], 0
    // Predicated region
    $region2: #{tpu_custom_call.1} parent=1 // pred_check
      _
    $region3: #{tpu_custom_call.1} parent=1 // pred_check_branch
      %15 = sbr.rel (0) target = $region5
    $region4: #{tpu_custom_call.1} parent=1 // pred_region
      %s17 = ssub.s32 1024, 1024
      %18 = vsyncadd [#allocation4], %s17
      %s19 = sshll.u32 [#allocation3], 4
      %s20 = int_to_ptr.vmem [resolvable:$true] %s19
      %25 = dma.hbm_to_vmem [thread:$0]  %s0, 1024, %s20, [#allocation4], 64, 64, 4
    $region5: #{tpu_custom_call.1} parent=1 // pred_fallthru
      _
    // Predicated region
    $region6: #{tpu_custom_call.1} parent=1 // pred_check
      _
    $region7: #{tpu_custom_call.1} parent=1 // pred_check_branch
      %27 = sbr.rel (0) target = $region9
    $region8: #{tpu_custom_call.1} parent=1 // pred_region
      %s29 = ssub.s32 1024, 1024
      %30 = vsyncadd [#allocation7], %s29
      %s31 = sshll.u32 [#allocation6], 4
      %s32 = int_to_ptr.vmem [resolvable:$true] %s31
      %37 = dma.hbm_to_vmem [thread:$0]  %s1, 1024, %s32, [#allocation7], 64, 64, 4
    $region9: #{tpu_custom_call.1} parent=1 // pred_fallthru
      _
    // Predicated region
    $region10: #{tpu_custom_call.1} parent=1 // pred_check
      _
    $region11: #{tpu_custom_call.1} parent=1 // pred_check_branch
      %39 = sbr.rel (0) target = $region13
    $region12: #{tpu_custom_call.1} parent=1 // pred_region
      _
    $region13: #{tpu_custom_call.1} parent=1 // pred_fallthru
      _
    // Predicated region
    $region14: #{tpu_custom_call.1} parent=1 // pred_check
      _
    $region15: #{tpu_custom_call.1} parent=1 // pred_check_branch
      %41 = sbr.rel (0) target = $region17
    $region16: #{tpu_custom_call.1} parent=1 // pred_region
      %42 = dma.done [#allocation4], 1024
    $region17: #{tpu_custom_call.1} parent=1 // pred_fallthru
      _
    // Predicated region
    $region18: #{tpu_custom_call.1} parent=1 // pred_check
      _
    $region19: #{tpu_custom_call.1} parent=1 // pred_check_branch
      %44 = sbr.rel (0) target = $region21
    $region20: #{tpu_custom_call.1} parent=1 // pred_region
      %45 = dma.done [#allocation7], 1024
    $region21: #{tpu_custom_call.1} parent=1 // pred_fallthru
      _
    %p47 = scmp.eq.s32.totalorder 0, 0
    // Predicated region
    $region22: #{tpu_custom_call.1} parent=1 // pred_check
      %p48 = pneg %p47
    $region23: #{tpu_custom_call.1} parent=1 // pred_check_branch
      %50 = sbr.rel (%p48) target = $region25
    $region24: #{tpu_custom_call.1} parent=1 // pred_region
      %51 = vst [vmem:[#allocation2] sm:$0xff] 0.0
      %52 = vst [vmem:[#allocation2 + $0x8] sm:$0xff] 0.0
      %53 = vst [vmem:[#allocation9] sm:$0xff] 0.0
      %54 = vst [vmem:[#allocation9 + $0x8] sm:$0xff] 0.0
    $region25: #{tpu_custom_call.1} parent=1 // pred_fallthru
      _
    %v55 = vld [vmem:[#allocation3] sm:$0xf]
    %v56 = vld [vmem:[#allocation3 + $0x4] sm:$0xf]
    %v57 = vld [vmem:[#allocation3 + $0x8] sm:$0xf]
    %v58 = vld [vmem:[#allocation3 + $0xc] sm:$0xf]
    %v59 = vld [vmem:[#allocation3 + $0x10] sm:$0xf]
    %v60 = vld [vmem:[#allocation3 + $0x14] sm:$0xf]
    %v61 = vld [vmem:[#allocation3 + $0x18] sm:$0xf]
    %v62 = vld [vmem:[#allocation3 + $0x1c] sm:$0xf]
    %v63 = vld [vmem:[#allocation3 + $0x20] sm:$0xf]
    %v64 = vld [vmem:[#allocation3 + $0x24] sm:$0xf]
    %v65 = vld [vmem:[#allocation3 + $0x28] sm:$0xf]
    %v66 = vld [vmem:[#allocation3 + $0x2c] sm:$0xf]
    %v67 = vld [vmem:[#allocation3 + $0x30] sm:$0xf]
    %v68 = vld [vmem:[#allocation3 + $0x34] sm:$0xf]
    %v69 = vld [vmem:[#allocation3 + $0x38] sm:$0xf]
    %v70 = vld [vmem:[#allocation3 + $0x3c] sm:$0xf]
    %v71 = vld [vmem:[#allocation6] sm:$0xf]
    %v72 = vld [vmem:[#allocation6 + $0x4] sm:$0xf]
    %v73 = vld [vmem:[#allocation6 + $0x8] sm:$0xf]
    %v74 = vld [vmem:[#allocation6 + $0xc] sm:$0xf]
    %v75 = vld [vmem:[#allocation6 + $0x10] sm:$0xf]
    %v76 = vld [vmem:[#allocation6 + $0x14] sm:$0xf]
    %v77 = vld [vmem:[#allocation6 + $0x18] sm:$0xf]
    %v78 = vld [vmem:[#allocation6 + $0x1c] sm:$0xf]
    %v79 = vld [vmem:[#allocation6 + $0x20] sm:$0xf]
    %v80 = vld [vmem:[#allocation6 + $0x24] sm:$0xf]
    %v81 = vld [vmem:[#allocation6 + $0x28] sm:$0xf]
    %v82 = vld [vmem:[#allocation6 + $0x2c] sm:$0xf]
    %v83 = vld [vmem:[#allocation6 + $0x30] sm:$0xf]
    %v84 = vld [vmem:[#allocation6 + $0x34] sm:$0xf]
    %v85 = vld [vmem:[#allocation6 + $0x38] sm:$0xf]
    %v86 = vld [vmem:[#allocation6 + $0x3c] sm:$0xf]
    %v87 = vld [vmem:[%s2] sm:$0x1]
    %v89 = vlaneseq
    %v90 = vshrl.u32 %v89, 7
    %v91 = vsub.s32 0, %v90
    %v92 = vrot.slane %v87, %v91
    %v110 = vunpack.c.l.b16 %v55
    %v111 = vunpack.c.l.b16 %v56
    %v112 = vunpack.c.l.b16 %v57
    %v113 = vunpack.c.l.b16 %v58
    %v114 = vunpack.c.l.b16 %v59
    %v115 = vunpack.c.l.b16 %v60
    %v116 = vunpack.c.l.b16 %v61
    %v117 = vunpack.c.l.b16 %v62
    %v118 = vunpack.c.l.b16 %v63
    %v119 = vunpack.c.l.b16 %v64
    %v120 = vunpack.c.l.b16 %v65
    %v121 = vunpack.c.l.b16 %v66
    %v122 = vunpack.c.l.b16 %v67
    %v123 = vunpack.c.l.b16 %v68
    %v124 = vunpack.c.l.b16 %v69
    %v125 = vunpack.c.l.b16 %v70
    %v126 = vpack.c.b16 %v111, %v110
    %v127 = vpack.c.b16 %v113, %v112
    %v128 = vpack.c.b16 %v115, %v114
    %v129 = vpack.c.b16 %v117, %v116
    %v130 = vpack.c.b16 %v119, %v118
    %v131 = vpack.c.b16 %v121, %v120
    %v132 = vpack.c.b16 %v123, %v122
    %v133 = vpack.c.b16 %v125, %v124
    %v158 = vunpack.c.l.b16 %v71
    %v159 = vunpack.c.l.b16 %v72
    %v160 = vunpack.c.l.b16 %v73
    %v161 = vunpack.c.l.b16 %v74
    %v162 = vunpack.c.l.b16 %v75
    %v163 = vunpack.c.l.b16 %v76
    %v164 = vunpack.c.l.b16 %v77
    %v165 = vunpack.c.l.b16 %v78
    %v166 = vunpack.c.l.b16 %v79
    %v167 = vunpack.c.l.b16 %v80
    %v168 = vunpack.c.l.b16 %v81
    %v169 = vunpack.c.l.b16 %v82
    %v170 = vunpack.c.l.b16 %v83
    %v171 = vunpack.c.l.b16 %v84
    %v172 = vunpack.c.l.b16 %v85
    %v173 = vunpack.c.l.b16 %v86
    %v174 = vpack.c.b16 %v159, %v158
    %v175 = vpack.c.b16 %v161, %v160
    %v176 = vpack.c.b16 %v163, %v162
    %v177 = vpack.c.b16 %v165, %v164
    %v178 = vpack.c.b16 %v167, %v166
    %v179 = vpack.c.b16 %v169, %v168
    %v180 = vpack.c.b16 %v171, %v170
    %v181 = vpack.c.b16 %v173, %v172
    %190 = vmatprep.subr.bf16.mxu0 0
    %191 = vmatpush1.bf16.msra.mxu0 %v181
    %192 = vmatprep.subr.bf16.mxu0 0
    %193 = vmatpush1.bf16.msra.mxu0 %v180
    %194 = vmatprep.subr.bf16.mxu0 0
    %195 = vmatpush1.bf16.msra.mxu0 %v179
    %196 = vmatprep.subr.bf16.mxu0 0
    %197 = vmatpush1.bf16.msra.mxu0 %v178
    %198 = vmatprep.subr.bf16.mxu0 0
    %199 = vmatpush1.bf16.msra.mxu0 %v177
    %200 = vmatprep.subr.bf16.mxu0 0
    %201 = vmatpush1.bf16.msra.mxu0 %v176
    %202 = vmatprep.subr.bf16.mxu0 0
    %203 = vmatpush1.bf16.msra.mxu0 %v175
    %204 = vmatprep.subr.bf16.mxu0 0
    %205 = vmatpush1.bf16.msra.mxu0 %v174
    %206 = vmatprep.subr.bf16.mxu0 0
    %207 = vmatpush2.bf16.msra.mxu0 0
    %208 = vmatprep.subr.bf16.mxu0 0
    %209 = vmatpush2.bf16.msra.mxu0 0
    %210 = vmatprep.subr.bf16.mxu0 0
    %211 = vmatpush2.bf16.msra.mxu0 0
    %212 = vmatprep.subr.bf16.mxu0 0
    %213 = vmatpush2.bf16.msra.mxu0 0
    %214 = vmatprep.subr.bf16.mxu0 0
    %215 = vmatpush2.bf16.msra.mxu0 0
    %216 = vmatprep.subr.bf16.mxu0 0
    %217 = vmatpush2.bf16.msra.mxu0 0
    %218 = vmatprep.subr.bf16.mxu0 0
    %219 = vmatpush2.bf16.msra.mxu0 0
    %220 = vmatprep.subr.bf16.mxu0 0
    %221 = vmatpush2.bf16.msra.mxu0 0
    %222 = vmatprep.mubr.bf16.mxu0 0
    %223 = vmatmul.mubr.bf16.gmra.mxu0 %v126
    %v224 = vpop.f32.mrf.mxu0
    %v225 = vadd.f32 %v92, %v224
    %v226 = vpop.f32.mrf.mxu0
    %v227 = vpop.f32.mrf.mxu0
    %v228 = vadd.f32 %v92, %v227
    %v229 = vpop.f32.mrf.mxu0
    %230 = vmatprep.mubr.bf16.mxu0 0
    %231 = vmatmul.mubr.bf16.gmra.mxu0 %v127
    %v232 = vpop.f32.mrf.mxu0
    %v233 = vadd.f32 %v92, %v232
    %v234 = vpop.f32.mrf.mxu0
    %v235 = vpop.f32.mrf.mxu0
    %v236 = vadd.f32 %v92, %v235
    %v237 = vpop.f32.mrf.mxu0
    %238 = vmatprep.mubr.bf16.mxu0 0
    %239 = vmatmul.mubr.bf16.gmra.mxu0 %v128
    %v240 = vpop.f32.mrf.mxu0
    %v241 = vadd.f32 %v92, %v240
    %v242 = vpop.f32.mrf.mxu0
    %v243 = vpop.f32.mrf.mxu0
    %v244 = vadd.f32 %v92, %v243
    %v245 = vpop.f32.mrf.mxu0
    %246 = vmatprep.mubr.bf16.mxu0 0
    %247 = vmatmul.mubr.bf16.gmra.mxu0 %v129
    %v248 = vpop.f32.mrf.mxu0
    %v249 = vadd.f32 %v92, %v248
    %v250 = vpop.f32.mrf.mxu0
    %v251 = vpop.f32.mrf.mxu0
    %v252 = vadd.f32 %v92, %v251
    %v253 = vpop.f32.mrf.mxu0
    %254 = vmatprep.mubr.bf16.mxu0 0
    %255 = vmatmul.mubr.bf16.gmra.mxu0 %v130
    %v256 = vpop.f32.mrf.mxu0
    %v257 = vadd.f32 %v92, %v256
    %v258 = vpop.f32.mrf.mxu0
    %v259 = vpop.f32.mrf.mxu0
    %v260 = vadd.f32 %v92, %v259
    %v261 = vpop.f32.mrf.mxu0
    %262 = vmatprep.mubr.bf16.mxu0 0
    %263 = vmatmul.mubr.bf16.gmra.mxu0 %v131
    %v264 = vpop.f32.mrf.mxu0
    %v265 = vadd.f32 %v92, %v264
    %v266 = vpop.f32.mrf.mxu0
    %v267 = vpop.f32.mrf.mxu0
    %v268 = vadd.f32 %v92, %v267
    %v269 = vpop.f32.mrf.mxu0
    %270 = vmatprep.mubr.bf16.mxu0 0
    %271 = vmatmul.mubr.bf16.gmra.mxu0 %v132
    %v272 = vpop.f32.mrf.mxu0
    %v273 = vadd.f32 %v92, %v272
    %v274 = vpop.f32.mrf.mxu0
    %v275 = vpop.f32.mrf.mxu0
    %v276 = vadd.f32 %v92, %v275
    %v277 = vpop.f32.mrf.mxu0
    %278 = vmatprep.mubr.bf16.mxu0 0
    %279 = vmatmul.mubr.bf16.gmra.mxu0 %v133
    %v280 = vpop.f32.mrf.mxu0
    %v281 = vadd.f32 %v92, %v280
    %v282 = vpop.f32.mrf.mxu0
    %v283 = vpop.f32.mrf.mxu0
    %v284 = vadd.f32 %v92, %v283
    %v285 = vpop.f32.mrf.mxu0
    %286 = vdwg.mxu0
    %v287 = vpack.c.bf16 %v228, %v225
    %v288 = vpack.c.bf16 %v236, %v233
    %v289 = vpack.c.bf16 %v244, %v241
    %v290 = vpack.c.bf16 %v252, %v249
    %v291 = vpack.c.bf16 %v260, %v257
    %v292 = vpack.c.bf16 %v268, %v265
    %v293 = vpack.c.bf16 %v276, %v273
    %v294 = vpack.c.bf16 %v284, %v281
    %v303 = vunpack.c.l.b16 %v287
    %v304 = vunpack.c.h.b16 %v287
    %v305 = vunpack.c.l.b16 %v288
    %v306 = vunpack.c.h.b16 %v288
    %v307 = vunpack.c.l.b16 %v289
    %v308 = vunpack.c.h.b16 %v289
    %v309 = vunpack.c.l.b16 %v290
    %v310 = vunpack.c.h.b16 %v290
    %v311 = vunpack.c.l.b16 %v291
    %v312 = vunpack.c.h.b16 %v291
    %v313 = vunpack.c.l.b16 %v292
    %v314 = vunpack.c.h.b16 %v292
    %v315 = vunpack.c.l.b16 %v293
    %v316 = vunpack.c.h.b16 %v293
    %v317 = vunpack.c.l.b16 %v294
    %v318 = vunpack.c.h.b16 %v294
    %v319 = vpack.c.b16 %v303, %v303
    %v320 = vpack.c.b16 %v304, %v304
    %v321 = vpack.c.b16 %v305, %v305
    %v322 = vpack.c.b16 %v306, %v306
    %v323 = vpack.c.b16 %v307, %v307
    %v324 = vpack.c.b16 %v308, %v308
    %v325 = vpack.c.b16 %v309, %v309
    %v326 = vpack.c.b16 %v310, %v310
    %v327 = vpack.c.b16 %v311, %v311
    %v328 = vpack.c.b16 %v312, %v312
    %v329 = vpack.c.b16 %v313, %v313
    %v330 = vpack.c.b16 %v314, %v314
    %v331 = vpack.c.b16 %v315, %v315
    %v332 = vpack.c.b16 %v316, %v316
    %v333 = vpack.c.b16 %v317, %v317
    %v334 = vpack.c.b16 %v318, %v318
    %351 = vst [vmem:[#allocation8] sm:$0xf] %v319
    %352 = vst [vmem:[#allocation8 + $0x4] sm:$0xf] %v320
    %353 = vst [vmem:[#allocation8 + $0x8] sm:$0xf] %v321
    %354 = vst [vmem:[#allocation8 + $0xc] sm:$0xf] %v322
    %355 = vst [vmem:[#allocation8 + $0x10] sm:$0xf] %v323
    %356 = vst [vmem:[#allocation8 + $0x14] sm:$0xf] %v324
    %357 = vst [vmem:[#allocation8 + $0x18] sm:$0xf] %v325
    %358 = vst [vmem:[#allocation8 + $0x1c] sm:$0xf] %v326
    %359 = vst [vmem:[#allocation8 + $0x20] sm:$0xf] %v327
    %360 = vst [vmem:[#allocation8 + $0x24] sm:$0xf] %v328
    %361 = vst [vmem:[#allocation8 + $0x28] sm:$0xf] %v329
    %362 = vst [vmem:[#allocation8 + $0x2c] sm:$0xf] %v330
    %363 = vst [vmem:[#allocation8 + $0x30] sm:$0xf] %v331
    %364 = vst [vmem:[#allocation8 + $0x34] sm:$0xf] %v332
    %365 = vst [vmem:[#allocation8 + $0x38] sm:$0xf] %v333
    %366 = vst [vmem:[#allocation8 + $0x3c] sm:$0xf] %v334
    %v367 = vld [vmem:[#allocation2] sm:$0xff]
    %v368 = vld [vmem:[#allocation2 + $0x8] sm:$0xff]
    %v369 = vld [vmem:[#allocation8] sm:$0xf]
    %v370 = vld [vmem:[#allocation8 + $0x4] sm:$0xf]
    %v371 = vunpack.c.l.bf16 %v369
    %v372 = vunpack.c.l.bf16 %v370
    %v373 = vadd.f32 %v367, %v371
    %v374 = vadd.f32 %v368, %v372
    %vm375 = vcmp.ge.f32.partialorder %v373, 1.0
    %vm376 = vcmp.ge.f32.partialorder %v374, 1.0
    %v377 = vsel %vm375, 1, 0
    %v378 = vsel %vm376, 1, 0
    %v379 = vcvt.s32.f32 %v377
    %v380 = vcvt.s32.f32 %v378
    %v381 = vpack.c.bf16 %v380, %v379
    %v383 = vunpack.c.l.b16 %v381
    %v384 = vunpack.c.h.b16 %v381
    %v385 = vpack.c.b16 %v383, %v383
    %v386 = vpack.c.b16 %v384, %v384
    %389 = vst [vmem:[#allocation8] sm:$0xf] %v385
    %390 = vst [vmem:[#allocation8 + $0x4] sm:$0xf] %v386
    %v391 = vld [vmem:[#allocation9] sm:$0xff]
    %v392 = vld [vmem:[#allocation9 + $0x8] sm:$0xff]
    %v393 = vadd.f32 %v391, %v379
    %v394 = vadd.f32 %v392, %v380
    %395 = vst [vmem:[#allocation9] sm:$0xff] %v393
    %396 = vst [vmem:[#allocation9 + $0x8] sm:$0xff] %v394
    %v397 = vsub.f32 %v373, %v379
    %v398 = vsub.f32 %v374, %v380
    %s399 = scalar_lea.vmem [#allocation8], 8
    %v400 = vld [vmem:[%s399] sm:$0xf]
    %v401 = vld [vmem:[%s399 + $0x4] sm:$0xf]
    %v402 = vunpack.c.l.bf16 %v400
    %v403 = vunpack.c.l.bf16 %v401
    %v404 = vadd.f32 %v397, %v402
    %v405 = vadd.f32 %v398, %v403
    %vm406 = vcmp.ge.f32.partialorder %v404, 1.0
    %vm407 = vcmp.ge.f32.partialorder %v405, 1.0
    %v408 = vsel %vm406, 1, 0
    %v409 = vsel %vm407, 1, 0
    %v410 = vcvt.s32.f32 %v408
    %v411 = vcvt.s32.f32 %v409
    %v412 = vpack.c.bf16 %v411, %v410
    %v414 = vunpack.c.l.b16 %v412
    %v415 = vunpack.c.h.b16 %v412
    %v416 = vpack.c.b16 %v414, %v414
    %v417 = vpack.c.b16 %v415, %v415
    %420 = vst [vmem:[%s399] sm:$0xf] %v416
    %421 = vst [vmem:[%s399 + $0x4] sm:$0xf] %v417
    %v422 = vld [vmem:[#allocation9] sm:$0xff]
    %v423 = vld [vmem:[#allocation9 + $0x8] sm:$0xff]
    %v424 = vadd.f32 %v422, %v410
    %v425 = vadd.f32 %v423, %v411
    %426 = vst [vmem:[#allocation9] sm:$0xff] %v424
    %427 = vst [vmem:[#allocation9 + $0x8] sm:$0xff] %v425
    %v428 = vsub.f32 %v404, %v410
    %v429 = vsub.f32 %v405, %v411
    %s430 = scalar_lea.vmem [#allocation8], 16
    %v431 = vld [vmem:[%s430] sm:$0xf]
    %v432 = vld [vmem:[%s430 + $0x4] sm:$0xf]
    %v433 = vunpack.c.l.bf16 %v431
    %v434 = vunpack.c.l.bf16 %v432
    %v435 = vadd.f32 %v428, %v433
    %v436 = vadd.f32 %v429, %v434
    %vm437 = vcmp.ge.f32.partialorder %v435, 1.0
    %vm438 = vcmp.ge.f32.partialorder %v436, 1.0
    %v439 = vsel %vm437, 1, 0
    %v440 = vsel %vm438, 1, 0
    %v441 = vcvt.s32.f32 %v439
    %v442 = vcvt.s32.f32 %v440
    %v443 = vpack.c.bf16 %v442, %v441
    %v445 = vunpack.c.l.b16 %v443
    %v446 = vunpack.c.h.b16 %v443
    %v447 = vpack.c.b16 %v445, %v445
    %v448 = vpack.c.b16 %v446, %v446
    %451 = vst [vmem:[%s430] sm:$0xf] %v447
    %452 = vst [vmem:[%s430 + $0x4] sm:$0xf] %v448
    %v453 = vld [vmem:[#allocation9] sm:$0xff]
    %v454 = vld [vmem:[#allocation9 + $0x8] sm:$0xff]
    %v455 = vadd.f32 %v453, %v441
    %v456 = vadd.f32 %v454, %v442
    %457 = vst [vmem:[#allocation9] sm:$0xff] %v455
    %458 = vst [vmem:[#allocation9 + $0x8] sm:$0xff] %v456
    %v459 = vsub.f32 %v435, %v441
    %v460 = vsub.f32 %v436, %v442
    %s461 = scalar_lea.vmem [#allocation8], 24
    %v462 = vld [vmem:[%s461] sm:$0xf]
    %v463 = vld [vmem:[%s461 + $0x4] sm:$0xf]
    %v464 = vunpack.c.l.bf16 %v462
    %v465 = vunpack.c.l.bf16 %v463
    %v466 = vadd.f32 %v459, %v464
    %v467 = vadd.f32 %v460, %v465
    %vm468 = vcmp.ge.f32.partialorder %v466, 1.0
    %vm469 = vcmp.ge.f32.partialorder %v467, 1.0
    %v470 = vsel %vm468, 1, 0
    %v471 = vsel %vm469, 1, 0
    %v472 = vcvt.s32.f32 %v470
    %v473 = vcvt.s32.f32 %v471
    %v474 = vpack.c.bf16 %v473, %v472
    %v476 = vunpack.c.l.b16 %v474
    %v477 = vunpack.c.h.b16 %v474
    %v478 = vpack.c.b16 %v476, %v476
    %v479 = vpack.c.b16 %v477, %v477
    %482 = vst [vmem:[%s461] sm:$0xf] %v478
    %483 = vst [vmem:[%s461 + $0x4] sm:$0xf] %v479
    %v484 = vld [vmem:[#allocation9] sm:$0xff]
    %v485 = vld [vmem:[#allocation9 + $0x8] sm:$0xff]
    %v486 = vadd.f32 %v484, %v472
    %v487 = vadd.f32 %v485, %v473
    %488 = vst [vmem:[#allocation9] sm:$0xff] %v486
    %489 = vst [vmem:[#allocation9 + $0x8] sm:$0xff] %v487
    %v490 = vsub.f32 %v466, %v472
    %v491 = vsub.f32 %v467, %v473
    %s492 = scalar_lea.vmem [#allocation8], 32
    %v493 = vld [vmem:[%s492] sm:$0xf]
    %v494 = vld [vmem:[%s492 + $0x4] sm:$0xf]
    %v495 = vunpack.c.l.bf16 %v493
    %v496 = vunpack.c.l.bf16 %v494
    %v497 = vadd.f32 %v490, %v495
    %v498 = vadd.f32 %v491, %v496
    %vm499 = vcmp.ge.f32.partialorder %v497, 1.0
    %vm500 = vcmp.ge.f32.partialorder %v498, 1.0
    %v501 = vsel %vm499, 1, 0
    %v502 = vsel %vm500, 1, 0
    %v503 = vcvt.s32.f32 %v501
    %v504 = vcvt.s32.f32 %v502
    %v505 = vpack.c.bf16 %v504, %v503
    %v507 = vunpack.c.l.b16 %v505
    %v508 = vunpack.c.h.b16 %v505
    %v509 = vpack.c.b16 %v507, %v507
    %v510 = vpack.c.b16 %v508, %v508
    %513 = vst [vmem:[%s492] sm:$0xf] %v509
    %514 = vst [vmem:[%s492 + $0x4] sm:$0xf] %v510
    %v515 = vld [vmem:[#allocation9] sm:$0xff]
    %v516 = vld [vmem:[#allocation9 + $0x8] sm:$0xff]
    %v517 = vadd.f32 %v515, %v503
    %v518 = vadd.f32 %v516, %v504
    %519 = vst [vmem:[#allocation9] sm:$0xff] %v517
    %520 = vst [vmem:[#allocation9 + $0x8] sm:$0xff] %v518
    %v521 = vsub.f32 %v497, %v503
    %v522 = vsub.f32 %v498, %v504
    %s523 = scalar_lea.vmem [#allocation8], 40
    %v524 = vld [vmem:[%s523] sm:$0xf]
    %v525 = vld [vmem:[%s523 + $0x4] sm:$0xf]
    %v526 = vunpack.c.l.bf16 %v524
    %v527 = vunpack.c.l.bf16 %v525
    %v528 = vadd.f32 %v521, %v526
    %v529 = vadd.f32 %v522, %v527
    %vm530 = vcmp.ge.f32.partialorder %v528, 1.0
    %vm531 = vcmp.ge.f32.partialorder %v529, 1.0
    %v532 = vsel %vm530, 1, 0
    %v533 = vsel %vm531, 1, 0
    %v534 = vcvt.s32.f32 %v532
    %v535 = vcvt.s32.f32 %v533
    %v536 = vpack.c.bf16 %v535, %v534
    %v538 = vunpack.c.l.b16 %v536
    %v539 = vunpack.c.h.b16 %v536
    %v540 = vpack.c.b16 %v538, %v538
    %v541 = vpack.c.b16 %v539, %v539
    %544 = vst [vmem:[%s523] sm:$0xf] %v540
    %545 = vst [vmem:[%s523 + $0x4] sm:$0xf] %v541
    %v546 = vld [vmem:[#allocation9] sm:$0xff]
    %v547 = vld [vmem:[#allocation9 + $0x8] sm:$0xff]
    %v548 = vadd.f32 %v546, %v534
    %v549 = vadd.f32 %v547, %v535
    %550 = vst [vmem:[#allocation9] sm:$0xff] %v548
    %551 = vst [vmem:[#allocation9 + $0x8] sm:$0xff] %v549
    %v552 = vsub.f32 %v528, %v534
    %v553 = vsub.f32 %v529, %v535
    %s554 = scalar_lea.vmem [#allocation8], 48
    %v555 = vld [vmem:[%s554] sm:$0xf]
    %v556 = vld [vmem:[%s554 + $0x4] sm:$0xf]
    %v557 = vunpack.c.l.bf16 %v555
    %v558 = vunpack.c.l.bf16 %v556
    %v559 = vadd.f32 %v552, %v557
    %v560 = vadd.f32 %v553, %v558
    %vm561 = vcmp.ge.f32.partialorder %v559, 1.0
    %vm562 = vcmp.ge.f32.partialorder %v560, 1.0
    %v563 = vsel %vm561, 1, 0
    %v564 = vsel %vm562, 1, 0
    %v565 = vcvt.s32.f32 %v563
    %v566 = vcvt.s32.f32 %v564
    %v567 = vpack.c.bf16 %v566, %v565
    %v569 = vunpack.c.l.b16 %v567
    %v570 = vunpack.c.h.b16 %v567
    %v571 = vpack.c.b16 %v569, %v569
    %v572 = vpack.c.b16 %v570, %v570
    %575 = vst [vmem:[%s554] sm:$0xf] %v571
    %576 = vst [vmem:[%s554 + $0x4] sm:$0xf] %v572
    %v577 = vld [vmem:[#allocation9] sm:$0xff]
    %v578 = vld [vmem:[#allocation9 + $0x8] sm:$0xff]
    %v579 = vadd.f32 %v577, %v565
    %v580 = vadd.f32 %v578, %v566
    %581 = vst [vmem:[#allocation9] sm:$0xff] %v579
    %582 = vst [vmem:[#allocation9 + $0x8] sm:$0xff] %v580
    %v583 = vsub.f32 %v559, %v565
    %v584 = vsub.f32 %v560, %v566
    %s585 = scalar_lea.vmem [#allocation8], 56
    %v586 = vld [vmem:[%s585] sm:$0xf]
    %v587 = vld [vmem:[%s585 + $0x4] sm:$0xf]
    %v588 = vunpack.c.l.bf16 %v586
    %v589 = vunpack.c.l.bf16 %v587
    %v590 = vadd.f32 %v583, %v588
    %v591 = vadd.f32 %v584, %v589
    %vm592 = vcmp.ge.f32.partialorder %v590, 1.0
    %vm593 = vcmp.ge.f32.partialorder %v591, 1.0
    %v594 = vsel %vm592, 1, 0
    %v595 = vsel %vm593, 1, 0
    %v596 = vcvt.s32.f32 %v594
    %v597 = vcvt.s32.f32 %v595
    %v598 = vpack.c.bf16 %v597, %v596
    %v600 = vunpack.c.l.b16 %v598
    %v601 = vunpack.c.h.b16 %v598
    %v602 = vpack.c.b16 %v600, %v600
    %v603 = vpack.c.b16 %v601, %v601
    %606 = vst [vmem:[%s585] sm:$0xf] %v602
    %607 = vst [vmem:[%s585 + $0x4] sm:$0xf] %v603
    %v608 = vld [vmem:[#allocation9] sm:$0xff]
    %v609 = vld [vmem:[#allocation9 + $0x8] sm:$0xff]
    %v610 = vadd.f32 %v608, %v596
    %v611 = vadd.f32 %v609, %v597
    %612 = vst [vmem:[#allocation9] sm:$0xff] %v610
    %613 = vst [vmem:[#allocation9 + $0x8] sm:$0xff] %v611
    %v614 = vsub.f32 %v590, %v596
    %v615 = vsub.f32 %v591, %v597
    %616 = vst [vmem:[#allocation2] sm:$0xff] %v614
    %617 = vst [vmem:[#allocation2 + $0x8] sm:$0xff] %v615
    // Predicated region
    $region26: #{tpu_custom_call.1} parent=1 // pred_check
      _
    $region27: #{tpu_custom_call.1} parent=1 // pred_check_branch
      %619 = sbr.rel (0) target = $region29
    $region28: #{tpu_custom_call.1} parent=1 // pred_region
      %s621 = ssub.s32 1024, 1024
      %622 = vsyncadd [#allocation5], %s621
      %s623 = sshll.u32 [#allocation8], 4
      %s624 = int_to_ptr.vmem [resolvable:$true] %s623
      %629 = dma.vmem_to_hbm [thread:$0]  %s624, 1024, %s3, [#allocation5], 64, 64, 4
    $region29: #{tpu_custom_call.1} parent=1 // pred_fallthru
      _
    // Predicated region
    $region30: #{tpu_custom_call.1} parent=1 // pred_check
      _
    $region31: #{tpu_custom_call.1} parent=1 // pred_check_branch
      %631 = sbr.rel (0) target = $region33
    $region32: #{tpu_custom_call.1} parent=1 // pred_region
      %s633 = ssub.s32 256, 256
      %634 = vsyncadd [#allocation10], %s633
      %s635 = sshll.u32 [#allocation9], 4
      %s636 = int_to_ptr.vmem [resolvable:$true] %s635
      %641 = dma.vmem_to_hbm [thread:$0]  %s636, 256, %s4, [#allocation10], 128, 128, 8
    $region33: #{tpu_custom_call.1} parent=1 // pred_fallthru
      _
    // Predicated region
    $region34: #{tpu_custom_call.1} parent=1 // pred_check
      _
    $region35: #{tpu_custom_call.1} parent=1 // pred_check_branch
      %643 = sbr.rel (0) target = $region37
    $region36: #{tpu_custom_call.1} parent=1 // pred_region
      %644 = dma.done [#allocation5], 1024
    $region37: #{tpu_custom_call.1} parent=1 // pred_fallthru
      _
    // Predicated region
    $region38: #{tpu_custom_call.1} parent=1 // pred_check
      _
    $region39: #{tpu_custom_call.1} parent=1 // pred_check_branch
      %646 = sbr.rel (0) target = $region41
    $region40: #{tpu_custom_call.1} parent=1 // pred_region
      %647 = dma.done [#allocation10], 256
    $region41: #{tpu_custom_call.1} parent=1 // pred_fallthru
      _
    %648 = vsyncpa [#allocation4], 1
    %649 = vsyncpa [#allocation7], 1
    %650 = vsyncpa [#allocation5], 1
    %651 = vsyncpa [#allocation10], 1

</llo_original>
